<compile_context>
chip_gen: v5e
topology: v5e:2x2
jax: 0.10.0
libtpu: 0.0.40
codegen_flags: <defaults>
</compile_context>

<pallas_src>
import functools
import numpy as np
import jax
import jax.numpy as jnp
from jax.experimental import pallas as pl
from jax.experimental.pallas import tpu as pltpu

# ----------------------------------------------------------------------------
# physics constants (values from credit.physics_constants; synthetic run)
# ----------------------------------------------------------------------------
GRAVITY = 9.80665
RAD_EARTH = 6371000.0
LH_WATER = 2.26e6
CP_DRY = 1005.0
CP_VAPOR = 1846.0


def _round_up(x, m):
    return ((x + m - 1) // m) * m


def _cdiv(a, b):
    return (a + b - 1) // b


def _row_block(needed, full):
    """Smallest 8-multiple >= needed usable as a sublane block dim (or the full dim)."""
    r = _round_up(needed, 8)
    return r if r < full else full


def _vmem_limit(bytes_needed):
    return int(min(64 * 2 ** 20, max(32 * 2 ** 20, int(bytes_needed * 1.5))))


def _column_const(values, rows):
    """(rows, 1) f32 column of compile-time scalars, built with iota + selects."""
    col = jnp.full((rows, 1), float(values[0]), jnp.float32)
    if rows > 1:
        r = jax.lax.broadcasted_iota(jnp.int32, (rows, 1), 0)
        for i in range(1, rows):
            col = jnp.where(r == i, float(values[i]), col)
    return col


# ----------------------------------------------------------------------------
# Pass A kernel: per (batch, s-outer) accumulated partial sums of
#   row 0: area-weighted column-total-energy difference (t0 - t1)  [well conditioned]
#   row 1: area-weighted column total energy at t1
#   row 2: area-weighted net TOA/surface flux  (the /N_seconds cancels later)
# Accumulation runs across the innermost ("arbitrary") s axis in the resident
# output block -- no intermediate HBM writeback.
# ----------------------------------------------------------------------------
def _energy_sums_kernel(cfg, x_ref, y_ref, gph_ref, area_ref, out_ref):
    (S, TS, n_inner, L,
     Tx0, Qx0, Ux0, Vx0,
     Ty0, Qy0, Uy0, Vy0,
     flux_lo, flux_span, w_over_g, flux_sign) = cfg

    so = pl.program_id(1)
    si = pl.program_id(2)

    # ragged-tail lane mask against compile-time S (never trust OOB reads)
    lane = jax.lax.broadcasted_iota(jnp.int32, (1, TS), 1)
    col0 = (so * n_inner + si) * TS
    valid = (col0 + lane) < S

    area = area_ref[...]           # (1, TS), zero on host-padded lanes
    gph = gph_ref[...]             # (1, TS) surface geopotential

    Tx = x_ref[pl.ds(Tx0, L), :].astype(jnp.float32)
    Qx = x_ref[pl.ds(Qx0, L), :].astype(jnp.float32)
    Ux = x_ref[pl.ds(Ux0, L), :].astype(jnp.float32)
    Vx = x_ref[pl.ds(Vx0, L), :].astype(jnp.float32)
    Ty = y_ref[pl.ds(Ty0, L), :].astype(jnp.float32)
    Qy = y_ref[pl.ds(Qy0, L), :].astype(jnp.float32)
    Uy = y_ref[pl.ds(Uy0, L), :].astype(jnp.float32)
    Vy = y_ref[pl.ds(Vy0, L), :].astype(jnp.float32)

    cp0 = (1.0 - Qx) * CP_DRY + Qx * CP_VAPOR
    cp1 = (1.0 - Qy) * CP_DRY + Qy * CP_VAPOR
    e0 = cp0 * Tx + (LH_WATER * Qx + gph + 0.5 * (Ux * Ux + Vx * Vx))
    e1 = cp1 * Ty + (LH_WATER * Qy + gph + 0.5 * (Uy * Uy + Vy * Vy))

    # full (L, TS) block times a (L, 1) trapz-weight column (1/GRAVITY folded in)
    w_col = _column_const(w_over_g, L)
    wa = w_col * area                                      # (L, TS)
    g_diff = jnp.sum(jnp.where(valid, (e0 - e1) * wa, 0.0))
    g_te1 = jnp.sum(jnp.where(valid, e1 * wa, 0.0))

    # net TOA/surface flux: one contiguous slab times a (span, 1) sign column
    sgn = _column_const(flux_sign, flux_span)
    flux = y_ref[pl.ds(flux_lo, flux_span), :].astype(jnp.float32)
    g_net = jnp.sum(jnp.where(valid, (flux * sgn) * area, 0.0))

    row = jax.lax.broadcasted_iota(jnp.int32, (8, 128), 0)
    contrib = jnp.where(row == 0, g_diff,
              jnp.where(row == 1, g_te1,
              jnp.where(row == 2, g_net, 0.0)))

    @pl.when(si == 0)
    def _init():
        out_ref[...] = jnp.zeros_like(out_ref)

    out_ref[...] += contrib


def energy_partial_sums(x_state, y3, gph, area, *, cfg, yA_rows, TS, n_outer, n_inner):
    B, NVX, _ = x_state.shape
    kernel = functools.partial(_energy_sums_kernel, cfg)
    bytes_needed = 2 * (NVX + yA_rows + 2) * TS * 4 + 8 * 128 * 4
    return pl.pallas_call(
        kernel,
        out_shape=jax.ShapeDtypeStruct((B, n_outer, 8, 128), jnp.float32),
        grid=(B, n_outer, n_inner),
        in_specs=[
            pl.BlockSpec((None, NVX, TS),
                         lambda b, so, si: (b, 0, so * n_inner + si)),
            pl.BlockSpec((None, yA_rows, TS),
                         lambda b, so, si: (b, 0, so * n_inner + si)),
            pl.BlockSpec((1, TS), lambda b, so, si: (0, so * n_inner + si)),
            pl.BlockSpec((1, TS), lambda b, so, si: (0, so * n_inner + si)),
        ],
        out_specs=pl.BlockSpec((None, None, 8, 128),
                               lambda b, so, si: (b, so, 0, 0)),
        compiler_params=pltpu.CompilerParams(
            dimension_semantics=("parallel", "parallel", "arbitrary"),
            vmem_limit_bytes=_vmem_limit(bytes_needed)),
    )(x_state, y3, gph, area)


# ----------------------------------------------------------------------------
# Pass B kernel: apply the per-batch scalar energy ratio and write the
# corrected temperature levels IN PLACE into y_pred (input_output_aliases).
# The output block covers rows [0, out_rows); rows outside the T band are
# copied through unchanged; everything else is preserved by the aliasing.
# ----------------------------------------------------------------------------
def _apply_ratio_kernel(cfg, ratio_ref, y_ref, gph_ref, out_ref):
    (L, Ts, Te, Qs, Us, Vs, out_rows) = cfg
    b = pl.program_id(0)
    ratio = ratio_ref[b]                       # per-batch scalar from SMEM
    gph = gph_ref[...]

    Ty = y_ref[pl.ds(Ts, L), :]
    Qy = y_ref[pl.ds(Qs, L), :]
    Uy = y_ref[pl.ds(Us, L), :]
    Vy = y_ref[pl.ds(Vs, L), :]

    cp1 = (1.0 - Qy) * CP_DRY + Qy * CP_VAPOR
    e_qgk = LH_WATER * Qy + gph + 0.5 * (Uy * Uy + Vy * Vy)
    e1 = cp1 * Ty + e_qgk
    t_corr = (e1 * ratio - e_qgk) * pl.reciprocal(cp1)

    if Ts > 0:
        out_ref[pl.ds(0, Ts), :] = y_ref[pl.ds(0, Ts), :]
    out_ref[pl.ds(Ts, L), :] = t_corr
    if out_rows > Te:
        out_ref[pl.ds(Te, out_rows - Te), :] = y_ref[pl.ds(Te, out_rows - Te), :]


def apply_energy_ratio(ratio, y3, gph, *, cfg, yB_rows, out_rows, TS):
    B, NV, S = y3.shape
    n_s = _cdiv(S, TS)
    kernel = functools.partial(_apply_ratio_kernel, cfg)
    bytes_needed = 2 * (yB_rows + 1 + out_rows) * TS * 4
    return pl.pallas_call(
        kernel,
        out_shape=jax.ShapeDtypeStruct((B, NV, S), jnp.float32),
        grid=(B, n_s),
        in_specs=[
            pl.BlockSpec(memory_space=pltpu.MemorySpace.SMEM),        # (B,) ratios
            pl.BlockSpec((None, yB_rows, TS), lambda b, s: (b, 0, s)),
            pl.BlockSpec((1, TS), lambda b, s: (0, s)),
        ],
        out_specs=pl.BlockSpec((None, out_rows, TS), lambda b, s: (b, 0, s)),
        input_output_aliases={1: 0},          # corrected T written in place into y
        compiler_params=pltpu.CompilerParams(
            dimension_semantics=("parallel", "parallel"),
            vmem_limit_bytes=_vmem_limit(bytes_needed)),
    )(ratio, y3, gph)


# ----------------------------------------------------------------------------
# host-side constants
# ----------------------------------------------------------------------------
def grid_area(lat2d_deg, lon2d_deg):
    """Spherical grid-cell area weights (physics_pressure_level.area equivalent)."""
    lat = np.deg2rad(lat2d_deg.astype(np.float64))
    lon = np.deg2rad(lon2d_deg.astype(np.float64))
    dlat = np.abs(np.gradient(lat, axis=0))
    dlon = np.abs(np.gradient(lon, axis=1))
    return (RAD_EARTH ** 2) * np.cos(lat) * dlat * dlon


def trapz_level_weights(p_level):
    """Per-level weights w s.t. sum_l w[l]*E[l] == trapezoid integral over p."""
    dp = np.diff(p_level.astype(np.float64))
    w = np.zeros(p_level.shape, dtype=np.float64)
    w[:-1] += 0.5 * dp
    w[1:] += 0.5 * dp
    return w


class GlobalEnergyFixerPallas:
    """Pallas-backed re-implementation of GlobalEnergyFixer (simple_demo mode)."""

    def __init__(self, post_conf, lane_tile=None):
        ge = post_conf['global_energy_fixer']
        assert ge['simple_demo'], "only the simple_demo pressure-level path is implemented"
        assert not ge['midpoint']          # TODO(synk): midpoint integral rule not implemented
        assert not ge.get('denorm', False)  # TODO(synk): denorm/state_trans scalers not implemented
        # TODO(synk): sigma-level (hybrid coefficient) integration branch not implemented.

        y_demo = np.array([90, 70, 50, 30, 10, -10, -30, -50, -70, -90], np.float64)
        x_demo = np.arange(0, 360, 20, dtype=np.float64)
        lon2d, lat2d = np.meshgrid(x_demo, y_demo)
        self.p_level = np.array([100, 30000, 50000, 70000, 80000, 90000, 100000],
                                np.float64)
        self.flag_midpoint = ge['midpoint']
        self.nlat, self.nlon = lat2d.shape
        self.S = self.nlat * self.nlon
        L = len(self.p_level)
        self.L = L

        # lane tile: large default (perf review: 8192-16384) to amortize the
        # ~0.35us fixed per-grid-step pipeline overhead; must be a 128 multiple.
        if lane_tile is None:
            lane_tile = min(16384, _round_up(self.S, 128))
        assert int(lane_tile) % 128 == 0
        self.lane_tile = int(lane_tile)
        self.n_s = _cdiv(self.S, self.lane_tile)
        self.S_pad = self.n_s * self.lane_tile

        # area / GPH_surf: host-built constants, lane-dense, zero-padded so
        # their blocks never read out of bounds (x/y tails are iota-masked).
        self.area2d = grid_area(lat2d, lon2d)
        area_flat = np.zeros((1, self.S_pad), np.float32)
        area_flat[0, :self.S] = self.area2d.reshape(-1)
        self.area = jnp.asarray(area_flat)

        self.gph2d = np.ones((self.nlat, self.nlon), np.float64)   # GPH_surf demo
        gph_flat = np.zeros((1, self.S_pad), np.float32)
        gph_flat[0, :self.S] = self.gph2d.reshape(-1)
        self.gph = jnp.asarray(gph_flat)

        # trapezoid level weights with 1/GRAVITY folded in -> compile-time scalars
        self.w_over_g = tuple(float(v) for v in
                              (trapz_level_weights(self.p_level) / GRAVITY))

        self.N_seconds = int(post_conf['data']['lead_time_periods']) * 3600

        self.T_ind_start = int(ge['T_inds'][0]); self.T_ind_end = int(ge['T_inds'][-1]) + 1
        self.q_ind_start = int(ge['q_inds'][0]); self.q_ind_end = int(ge['q_inds'][-1]) + 1
        self.U_ind_start = int(ge['U_inds'][0]); self.U_ind_end = int(ge['U_inds'][-1]) + 1
        self.V_ind_start = int(ge['V_inds'][0]); self.V_ind_end = int(ge['V_inds'][-1]) + 1
        self.TOA_solar_ind = int(ge['TOA_rad_inds'][0])
        self.TOA_OLR_ind = int(ge['TOA_rad_inds'][1])
        self.surf_solar_ind = int(ge['surf_rad_inds'][0])
        self.surf_LR_ind = int(ge['surf_rad_inds'][1])
        self.surf_SH_ind = int(ge['surf_flux_inds'][0])
        self.surf_LH_ind = int(ge['surf_flux_inds'][1])
        for s, e in ((self.T_ind_start, self.T_ind_end),
                     (self.q_ind_start, self.q_ind_end),
                     (self.U_ind_start, self.U_ind_end),
                     (self.V_ind_start, self.V_ind_end)):
            assert e - s == L, "each of T/q/U/V must have one entry per pressure level"
        self.state_lo = min(self.T_ind_start, self.q_ind_start,
                            self.U_ind_start, self.V_ind_start)
        self.state_hi = max(self.T_ind_end, self.q_ind_end,
                            self.U_ind_end, self.V_ind_end)

        # flux rows as one contiguous slab + compile-time sign column
        flux_idx = [self.TOA_solar_ind, self.TOA_OLR_ind, self.surf_solar_ind,
                    self.surf_LR_ind, self.surf_SH_ind, self.surf_LH_ind]
        flux_sgn = [1.0, 1.0, -1.0, -1.0, -1.0, -1.0]
        self.flux_lo = min(flux_idx)
        self.flux_span = max(flux_idx) + 1 - self.flux_lo
        sign_col = [0.0] * self.flux_span
        for idx, sg in zip(flux_idx, flux_sgn):
            sign_col[idx - self.flux_lo] += sg
        self.flux_sign = tuple(sign_col)

        # y_pred is donated so pass B can alias its buffer (in-place T fix).
        self._forward = jax.jit(self._forward_impl, donate_argnums=(1,))

    # ------------------------------------------------------------------
    def _forward_impl(self, x_input, y_pred):
        B, NV = y_pred.shape[0], y_pred.shape[1]
        nlat, nlon = y_pred.shape[-2], y_pred.shape[-1]
        assert (nlat, nlon) == (self.nlat, self.nlon)
        assert y_pred.shape[2] == 1
        S, TS, L, n_s = self.S, self.lane_tile, self.L, self.n_s

        # megacore: keep a "parallel" axis with >=2 blocks.  B when B >= 2,
        # else split s into an outer parallel chunk (only when it divides
        # evenly so no fully-out-of-bounds blocks are ever generated).
        n_outer = 1
        if B < 2:
            for c in (8, 4, 2):
                if n_s % c == 0 and n_s > 1:
                    n_outer = c
                    break
        n_inner = n_s // n_outer

        # free reshapes: merge the trailing (time, lat, lon) dims -- no padding.
        y3 = y_pred.astype(jnp.float32).reshape(B, NV, S)
        # last input time step of the state rows (single strided-slice copy);
        # streamed in its native dtype and upcast inside the kernel.
        x_state = x_input[:, self.state_lo:self.state_hi, -1, :, :].reshape(
            B, self.state_hi - self.state_lo, S)

        yA_rows = _row_block(max(self.state_hi, self.flux_lo + self.flux_span), NV)
        yB_rows = _row_block(self.state_hi, NV)
        out_rows = _row_block(self.T_ind_end, NV)

        cfg_a = (S, TS, n_inner, L,
                 self.T_ind_start - self.state_lo, self.q_ind_start - self.state_lo,
                 self.U_ind_start - self.state_lo, self.V_ind_start - self.state_lo,
                 self.T_ind_start, self.q_ind_start, self.U_ind_start, self.V_ind_start,
                 self.flux_lo, self.flux_span, self.w_over_g, self.flux_sign)
        partials = energy_partial_sums(x_state, y3, self.gph, self.area,
                                       cfg=cfg_a, yA_rows=yA_rows, TS=TS,
                                       n_outer=n_outer, n_inner=n_inner)
        g_diff = jnp.sum(partials[:, :, 0, 0], axis=1)   # sum((TE_t0 - TE_t1) * area)
        g_te1 = jnp.sum(partials[:, :, 1, 0], axis=1)
        g_net = jnp.sum(partials[:, :, 2, 0], axis=1)    # N_sec*(R_T - F_S) sums (N_sec cancels)
        ratio = 1.0 + (g_diff + g_net) / g_te1           # well-conditioned form

        cfg_b = (L, self.T_ind_start, self.T_ind_end,
                 self.q_ind_start, self.U_ind_start, self.V_ind_start, out_rows)
        y_out3 = apply_energy_ratio(ratio.astype(jnp.float32), y3, self.gph,
                                    cfg=cfg_b, yB_rows=yB_rows,
                                    out_rows=out_rows, TS=TS)
        return y_out3.reshape(B, NV, 1, nlat, nlon)

    def __call__(self, x):
        y_fixed = self._forward(x['x'], x['y_pred'])
        out = dict(x)
        out['y_pred'] = y_fixed
        return out


# ----------------------------------------------------------------------------
# pure-numpy reference (mirrors the PyTorch forward) for a correctness check
# ----------------------------------------------------------------------------
def reference_fix(fixer, x_input, y_pred):
    xi = np.asarray(x_input, np.float64)
    yp = np.asarray(y_pred, np.float64)
    Ts, Te = fixer.T_ind_start, fixer.T_ind_end
    qs, qe = fixer.q_ind_start, fixer.q_ind_end
    Us, Ue = fixer.U_ind_start, fixer.U_ind_end
    Vs, Ve = fixer.V_ind_start, fixer.V_ind_end
    area = fixer.area2d
    gph = fixer.gph2d
    n_sec = fixer.N_seconds

    T0 = xi[:, Ts:Te, -1]; q0 = xi[:, qs:qe, -1]
    U0 = xi[:, Us:Ue, -1]; V0 = xi[:, Vs:Ve, -1]
    T1 = yp[:, Ts:Te, 0]; q1 = yp[:, qs:qe, 0]
    U1 = yp[:, Us:Ue, 0]; V1 = yp[:, Vs:Ve, 0]
    TOA_s = yp[:, fixer.TOA_solar_ind, 0]; TOA_o = yp[:, fixer.TOA_OLR_ind, 0]
    sf_s = yp[:, fixer.surf_solar_ind, 0]; sf_l = yp[:, fixer.surf_LR_ind, 0]
    sh = yp[:, fixer.surf_SH_ind, 0]; lh = yp[:, fixer.surf_LH_ind, 0]

    cp0 = (1 - q0) * CP_DRY + q0 * CP_VAPOR
    cp1 = (1 - q1) * CP_DRY + q1 * CP_VAPOR
    ken0 = 0.5 * (U0 ** 2 + V0 ** 2)
    ken1 = 0.5 * (U1 ** 2 + V1 ** 2)
    eq0 = LH_WATER * q0 + gph + ken0
    eq1 = LH_WATER * q1 + gph + ken1
    R_T = (TOA_s + TOA_o) / n_sec
    F_S = (sf_s + sf_l + sh + lh) / n_sec
    RT_sum = (R_T * area).sum(axis=(-2, -1))
    FS_sum = (F_S * area).sum(axis=(-2, -1))
    E0 = cp0 * T0 + eq0
    E1 = cp1 * T1 + eq1
    dp = np.diff(fixer.p_level)
    TE0 = (0.5 * (E0[:, :-1] + E0[:, 1:]) * dp[None, :, None, None]).sum(1) / GRAVITY
    TE1 = (0.5 * (E1[:, :-1] + E1[:, 1:]) * dp[None, :, None, None]).sum(1) / GRAVITY
    g0 = (TE0 * area).sum(axis=(-2, -1))
    g1 = (TE1 * area).sum(axis=(-2, -1))
    ratio = ((n_sec * (RT_sum - FS_sum) + g0) / g1)[:, None, None, None]
    T1c = (E1 * ratio - eq1) / cp1
    yp_out = yp.copy()
    yp_out[:, Ts:Te, 0] = T1c
    return yp_out


if __name__ == "__main__":
    post_conf = {
        'global_energy_fixer': {
            'simple_demo': True,
            'midpoint': False,
            'denorm': False,
            'T_inds': [0, 6],
            'q_inds': [7, 13],
            'U_inds': [14, 20],
            'V_inds': [21, 27],
            'TOA_rad_inds': [28, 29],
            'surf_rad_inds': [30, 31],
            'surf_flux_inds': [32, 33],
        },
        'data': {'lead_time_periods': 6},
    }
    # lane_tile=128 -> S=180 splits into 2 lane tiles, exercising the multi-tile
    # accumulation and ragged-tail masking paths (the production structure).
    fixer = GlobalEnergyFixerPallas(post_conf, lane_tile=128)

    B, NV, T_hist, nlat, nlon = 2, 34, 2, 10, 18
    key = jax.random.PRNGKey(0)
    kx, ky = jax.random.split(key)

    scale = np.ones((NV,), np.float32)
    offset = np.zeros((NV,), np.float32)
    offset[0:7] = 260.0;  scale[0:7] = 10.0       # temperatures [K]
    offset[7:14] = 0.004; scale[7:14] = 0.001     # specific humidity
    offset[14:28] = 0.0;  scale[14:28] = 10.0     # U, V winds
    offset[28:34] = 0.0;  scale[28:34] = 100.0    # radiation / fluxes

    sc = jnp.asarray(scale)[None, :, None, None, None]
    of = jnp.asarray(offset)[None, :, None, None, None]
    x_input = jax.random.normal(kx, (B, NV, T_hist, nlat, nlon), jnp.float32) * sc + of
    y_pred = jax.random.normal(ky, (B, NV, 1, nlat, nlon), jnp.float32) * sc + of

    # keep host copies before calling (y_pred is donated / written in place)
    x_np = np.asarray(x_input)
    y_np = np.asarray(y_pred)
    ref = reference_fix(fixer, x_np, y_np)

    out = fixer({'x': x_input, 'y_pred': y_pred})
    y_fixed = np.asarray(jax.block_until_ready(out['y_pred']))

    assert y_fixed.shape == y_np.shape
    np.testing.assert_allclose(y_fixed[:, 0:7], ref[:, 0:7], rtol=2e-3, atol=5e-2)
    np.testing.assert_allclose(y_fixed[:, 7:], ref[:, 7:], rtol=1e-6, atol=1e-6)

    # also exercise the B=1 path (the s axis supplies the parallel megacore split)
    out1 = fixer({'x': jnp.asarray(x_np[:1]), 'y_pred': jnp.asarray(y_np[:1])})
    y_fixed1 = np.asarray(jax.block_until_ready(out1['y_pred']))
    np.testing.assert_allclose(y_fixed1[:, 0:7], ref[:1, 0:7], rtol=2e-3, atol=5e-2)
    np.testing.assert_allclose(y_fixed1[:, 7:], ref[:1, 7:], rtol=1e-6, atol=1e-6)

    print("KERNEL_OK")
</pallas_src>

<mosaic_0001>
module attributes {stable_mosaic.version = 11 : i64} {
  func.func @_energy_sums_kernel(%arg0: i32, %arg1: i32, %arg2: i32, %arg3: memref<1x28x128xf32, #tpu.memory_space<vmem>>, %arg4: memref<1x34x128xf32, #tpu.memory_space<vmem>>, %arg5: memref<1x128xf32, #tpu.memory_space<vmem>>, %arg6: memref<1x128xf32, #tpu.memory_space<vmem>>, %arg7: memref<1x1x8x128xf32, #tpu.memory_space<vmem>>) attributes {dimension_semantics = [#tpu.dimension_semantics<parallel>, #tpu.dimension_semantics<parallel>, #tpu.dimension_semantics<arbitrary>], iteration_bounds = array<i64: 2, 1, 2>, scalar_prefetch = 0 : i64, scratch_operands = 0 : i64, tpu.core_type = #tpu.core_type<tc>, window_params = [{transform_indices = @transform_0, window_bounds = array<i64: 1, 28, 128>}, {transform_indices = @transform_1, window_bounds = array<i64: 1, 34, 128>}, {transform_indices = @transform_2, window_bounds = array<i64: 1, 128>}, {transform_indices = @transform_3, window_bounds = array<i64: 1, 128>}, {transform_indices = @transform_4, window_bounds = array<i64: 1, 1, 8, 128>}]} {
    %0 = tpu.iota {dimensions = array<i32: 1>} : vector<1x128xi32>
    %c2_i32 = arith.constant 2 : i32
    %1 = arith.muli %arg1, %c2_i32 : i32
    %2 = arith.addi %1, %arg2 : i32
    %c128_i32 = arith.constant 128 : i32
    %3 = arith.muli %2, %c128_i32 : i32
    %4 = vector.broadcast %3 : i32 to vector<1x128xi32>
    %5 = arith.addi %4, %0 : vector<1x128xi32>
    %c180_i32 = arith.constant 180 : i32
    %6 = vector.broadcast %c180_i32 : i32 to vector<1x128xi32>
    %7 = arith.cmpi slt, %5, %6 : vector<1x128xi32>
    %c0 = arith.constant 0 : index
    %c0_0 = arith.constant 0 : index
    %8 = vector.load %arg6[%c0, %c0_0] : memref<1x128xf32, #tpu.memory_space<vmem>>, vector<1x128xf32>
    %c0_1 = arith.constant 0 : index
    %c0_2 = arith.constant 0 : index
    %9 = vector.load %arg5[%c0_1, %c0_2] : memref<1x128xf32, #tpu.memory_space<vmem>>, vector<1x128xf32>
    %c0_3 = arith.constant 0 : index
    %c0_4 = arith.constant 0 : index
    %c0_5 = arith.constant 0 : index
    %10 = vector.load %arg3[%c0_3, %c0_4, %c0_5] : memref<1x28x128xf32, #tpu.memory_space<vmem>>, vector<1x7x128xf32>
    %11 = vector.shape_cast %10 : vector<1x7x128xf32> to vector<7x128xf32>
    %c0_6 = arith.constant 0 : index
    %c7 = arith.constant 7 : index
    %c0_7 = arith.constant 0 : index
    %12 = vector.load %arg3[%c0_6, %c7, %c0_7] : memref<1x28x128xf32, #tpu.memory_space<vmem>>, vector<1x7x128xf32>
    %13 = vector.shape_cast %12 : vector<1x7x128xf32> to vector<7x128xf32>
    %c0_8 = arith.constant 0 : index
    %c14 = arith.constant 14 : index
    %c0_9 = arith.constant 0 : index
    %14 = vector.load %arg3[%c0_8, %c14, %c0_9] : memref<1x28x128xf32, #tpu.memory_space<vmem>>, vector<1x7x128xf32>
    %15 = vector.shape_cast %14 : vector<1x7x128xf32> to vector<7x128xf32>
    %c0_10 = arith.constant 0 : index
    %c21 = arith.constant 21 : index
    %c0_11 = arith.constant 0 : index
    %16 = vector.load %arg3[%c0_10, %c21, %c0_11] : memref<1x28x128xf32, #tpu.memory_space<vmem>>, vector<1x7x128xf32>
    %17 = vector.shape_cast %16 : vector<1x7x128xf32> to vector<7x128xf32>
    %c0_12 = arith.constant 0 : index
    %c0_13 = arith.constant 0 : index
    %c0_14 = arith.constant 0 : index
    %18 = vector.load %arg4[%c0_12, %c0_13, %c0_14] : memref<1x34x128xf32, #tpu.memory_space<vmem>>, vector<1x7x128xf32>
    %19 = vector.shape_cast %18 : vector<1x7x128xf32> to vector<7x128xf32>
    %c0_15 = arith.constant 0 : index
    %c7_16 = arith.constant 7 : index
    %c0_17 = arith.constant 0 : index
    %20 = vector.load %arg4[%c0_15, %c7_16, %c0_17] : memref<1x34x128xf32, #tpu.memory_space<vmem>>, vector<1x7x128xf32>
    %21 = vector.shape_cast %20 : vector<1x7x128xf32> to vector<7x128xf32>
    %c0_18 = arith.constant 0 : index
    %c14_19 = arith.constant 14 : index
    %c0_20 = arith.constant 0 : index
    %22 = vector.load %arg4[%c0_18, %c14_19, %c0_20] : memref<1x34x128xf32, #tpu.memory_space<vmem>>, vector<1x7x128xf32>
    %23 = vector.shape_cast %22 : vector<1x7x128xf32> to vector<7x128xf32>
    %c0_21 = arith.constant 0 : index
    %c21_22 = arith.constant 21 : index
    %c0_23 = arith.constant 0 : index
    %24 = vector.load %arg4[%c0_21, %c21_22, %c0_23] : memref<1x34x128xf32, #tpu.memory_space<vmem>>, vector<1x7x128xf32>
    %25 = vector.shape_cast %24 : vector<1x7x128xf32> to vector<7x128xf32>
    %cst = arith.constant 1.000000e+00 : f32
    %26 = vector.broadcast %cst : f32 to vector<7x128xf32>
    %27 = arith.subf %26, %13 : vector<7x128xf32>
    %cst_24 = arith.constant 1.005000e+03 : f32
    %28 = vector.broadcast %cst_24 : f32 to vector<7x128xf32>
    %29 = arith.mulf %27, %28 : vector<7x128xf32>
    %cst_25 = arith.constant 1.846000e+03 : f32
    %30 = vector.broadcast %cst_25 : f32 to vector<7x128xf32>
    %31 = arith.mulf %13, %30 : vector<7x128xf32>
    %32 = arith.addf %29, %31 : vector<7x128xf32>
    %cst_26 = arith.constant 1.000000e+00 : f32
    %33 = vector.broadcast %cst_26 : f32 to vector<7x128xf32>
    %34 = arith.subf %33, %21 : vector<7x128xf32>
    %cst_27 = arith.constant 1.005000e+03 : f32
    %35 = vector.broadcast %cst_27 : f32 to vector<7x128xf32>
    %36 = arith.mulf %34, %35 : vector<7x128xf32>
    %cst_28 = arith.constant 1.846000e+03 : f32
    %37 = vector.broadcast %cst_28 : f32 to vector<7x128xf32>
    %38 = arith.mulf %21, %37 : vector<7x128xf32>
    %39 = arith.addf %36, %38 : vector<7x128xf32>
    %40 = arith.mulf %32, %11 : vector<7x128xf32>
    %cst_29 = arith.constant 2.260000e+06 : f32
    %41 = vector.broadcast %cst_29 : f32 to vector<7x128xf32>
    %42 = arith.mulf %41, %13 : vector<7x128xf32>
    %43 = vector.broadcast %9 : vector<1x128xf32> to vector<7x128xf32>
    %44 = arith.addf %42, %43 : vector<7x128xf32>
    %45 = arith.mulf %15, %15 : vector<7x128xf32>
    %46 = arith.mulf %17, %17 : vector<7x128xf32>
    %47 = arith.addf %45, %46 : vector<7x128xf32>
    %cst_30 = arith.constant 5.000000e-01 : f32
    %48 = vector.broadcast %cst_30 : f32 to vector<7x128xf32>
    %49 = arith.mulf %48, %47 : vector<7x128xf32>
    %50 = arith.addf %44, %49 : vector<7x128xf32>
    %51 = arith.addf %40, %50 : vector<7x128xf32>
    %52 = arith.mulf %39, %19 : vector<7x128xf32>
    %cst_31 = arith.constant 2.260000e+06 : f32
    %53 = vector.broadcast %cst_31 : f32 to vector<7x128xf32>
    %54 = arith.mulf %53, %21 : vector<7x128xf32>
    %55 = vector.broadcast %9 : vector<1x128xf32> to vector<7x128xf32>
    %56 = arith.addf %54, %55 : vector<7x128xf32>
    %57 = arith.mulf %23, %23 : vector<7x128xf32>
    %58 = arith.mulf %25, %25 : vector<7x128xf32>
    %59 = arith.addf %57, %58 : vector<7x128xf32>
    %cst_32 = arith.constant 5.000000e-01 : f32
    %60 = vector.broadcast %cst_32 : f32 to vector<7x128xf32>
    %61 = arith.mulf %60, %59 : vector<7x128xf32>
    %62 = arith.addf %56, %61 : vector<7x128xf32>
    %63 = arith.addf %52, %62 : vector<7x128xf32>
    %cst_33 = arith.constant 1524.47571 : f32
    %64 = vector.broadcast %cst_33 : f32 to vector<7x1xf32>
    %65 = tpu.iota {dimensions = array<i32: 0>} : vector<7x1xi32>
    %c1_i32 = arith.constant 1 : i32
    %66 = vector.broadcast %c1_i32 : i32 to vector<7x1xi32>
    %67 = arith.cmpi eq, %65, %66 : vector<7x1xi32>
    %cst_34 = arith.constant 2544.19189 : f32
    %68 = vector.broadcast %cst_34 : f32 to vector<7x1xf32>
    %69 = arith.select %67, %68, %64 : vector<7x1xi1>, vector<7x1xf32>
    %c2_i32_35 = arith.constant 2 : i32
    %70 = vector.broadcast %c2_i32_35 : i32 to vector<7x1xi32>
    %71 = arith.cmpi eq, %65, %70 : vector<7x1xi32>
    %cst_36 = arith.constant 2039.43237 : f32
    %72 = vector.broadcast %cst_36 : f32 to vector<7x1xf32>
    %73 = arith.select %71, %72, %69 : vector<7x1xi1>, vector<7x1xf32>
    %c3_i32 = arith.constant 3 : i32
    %74 = vector.broadcast %c3_i32 : i32 to vector<7x1xi32>
    %75 = arith.cmpi eq, %65, %74 : vector<7x1xi32>
    %cst_37 = arith.constant 1529.57434 : f32
    %76 = vector.broadcast %cst_37 : f32 to vector<7x1xf32>
    %77 = arith.select %75, %76, %73 : vector<7x1xi1>, vector<7x1xf32>
    %c4_i32 = arith.constant 4 : i32
    %78 = vector.broadcast %c4_i32 : i32 to vector<7x1xi32>
    %79 = arith.cmpi eq, %65, %78 : vector<7x1xi32>
    %cst_38 = arith.constant 1019.71619 : f32
    %80 = vector.broadcast %cst_38 : f32 to vector<7x1xf32>
    %81 = arith.select %79, %80, %77 : vector<7x1xi1>, vector<7x1xf32>
    %c5_i32 = arith.constant 5 : i32
    %82 = vector.broadcast %c5_i32 : i32 to vector<7x1xi32>
    %83 = arith.cmpi eq, %65, %82 : vector<7x1xi32>
    %cst_39 = arith.constant 1019.71619 : f32
    %84 = vector.broadcast %cst_39 : f32 to vector<7x1xf32>
    %85 = arith.select %83, %84, %81 : vector<7x1xi1>, vector<7x1xf32>
    %c6_i32 = arith.constant 6 : i32
    %86 = vector.broadcast %c6_i32 : i32 to vector<7x1xi32>
    %87 = arith.cmpi eq, %65, %86 : vector<7x1xi32>
    %cst_40 = arith.constant 509.858093 : f32
    %88 = vector.broadcast %cst_40 : f32 to vector<7x1xf32>
    %89 = arith.select %87, %88, %85 : vector<7x1xi1>, vector<7x1xf32>
    %90 = vector.broadcast %89 : vector<7x1xf32> to vector<7x128xf32>
    %91 = vector.broadcast %8 : vector<1x128xf32> to vector<7x128xf32>
    %92 = arith.mulf %90, %91 : vector<7x128xf32>
    %93 = arith.subf %51, %63 : vector<7x128xf32>
    %94 = arith.mulf %93, %92 : vector<7x128xf32>
    %cst_41 = arith.constant 0.000000e+00 : f32
    %95 = vector.shape_cast %7 : vector<1x128xi1> to vector<1x128xi1>
    %96 = vector.broadcast %95 : vector<1x128xi1> to vector<7x128xi1>
    %97 = vector.broadcast %cst_41 : f32 to vector<7x128xf32>
    %98 = arith.select %96, %94, %97 : vector<7x128xi1>, vector<7x128xf32>
    %99 = vector.shape_cast %98 : vector<7x128xf32> to vector<1x7x128xf32>
    %cst_42 = arith.constant dense<0.000000e+00> : vector<1xf32>
    %100 = vector.multi_reduction <add>, %99, %cst_42 [1, 2] : vector<1x7x128xf32> to vector<1xf32>
    %101 = vector.shape_cast %100 : vector<1xf32> to vector<1x1x1xf32>
    %102 = vector.extract %101[0, 0, 0] : f32 from vector<1x1x1xf32>
    %103 = arith.mulf %63, %92 : vector<7x128xf32>
    %cst_43 = arith.constant 0.000000e+00 : f32
    %104 = vector.shape_cast %7 : vector<1x128xi1> to vector<1x128xi1>
    %105 = vector.broadcast %104 : vector<1x128xi1> to vector<7x128xi1>
    %106 = vector.broadcast %cst_43 : f32 to vector<7x128xf32>
    %107 = arith.select %105, %103, %106 : vector<7x128xi1>, vector<7x128xf32>
    %108 = vector.shape_cast %107 : vector<7x128xf32> to vector<1x7x128xf32>
    %cst_44 = arith.constant dense<0.000000e+00> : vector<1xf32>
    %109 = vector.multi_reduction <add>, %108, %cst_44 [1, 2] : vector<1x7x128xf32> to vector<1xf32>
    %110 = vector.shape_cast %109 : vector<1xf32> to vector<1x1x1xf32>
    %111 = vector.extract %110[0, 0, 0] : f32 from vector<1x1x1xf32>
    %cst_45 = arith.constant 1.000000e+00 : f32
    %112 = vector.broadcast %cst_45 : f32 to vector<6x1xf32>
    %113 = tpu.iota {dimensions = array<i32: 0>} : vector<6x1xi32>
    %c1_i32_46 = arith.constant 1 : i32
    %114 = vector.broadcast %c1_i32_46 : i32 to vector<6x1xi32>
    %115 = arith.cmpi eq, %113, %114 : vector<6x1xi32>
    %cst_47 = arith.constant 1.000000e+00 : f32
    %116 = vector.broadcast %cst_47 : f32 to vector<6x1xf32>
    %117 = arith.select %115, %116, %112 : vector<6x1xi1>, vector<6x1xf32>
    %c2_i32_48 = arith.constant 2 : i32
    %118 = vector.broadcast %c2_i32_48 : i32 to vector<6x1xi32>
    %119 = arith.cmpi eq, %113, %118 : vector<6x1xi32>
    %cst_49 = arith.constant -1.000000e+00 : f32
    %120 = vector.broadcast %cst_49 : f32 to vector<6x1xf32>
    %121 = arith.select %119, %120, %117 : vector<6x1xi1>, vector<6x1xf32>
    %c3_i32_50 = arith.constant 3 : i32
    %122 = vector.broadcast %c3_i32_50 : i32 to vector<6x1xi32>
    %123 = arith.cmpi eq, %113, %122 : vector<6x1xi32>
    %cst_51 = arith.constant -1.000000e+00 : f32
    %124 = vector.broadcast %cst_51 : f32 to vector<6x1xf32>
    %125 = arith.select %123, %124, %121 : vector<6x1xi1>, vector<6x1xf32>
    %c4_i32_52 = arith.constant 4 : i32
    %126 = vector.broadcast %c4_i32_52 : i32 to vector<6x1xi32>
    %127 = arith.cmpi eq, %113, %126 : vector<6x1xi32>
    %cst_53 = arith.constant -1.000000e+00 : f32
    %128 = vector.broadcast %cst_53 : f32 to vector<6x1xf32>
    %129 = arith.select %127, %128, %125 : vector<6x1xi1>, vector<6x1xf32>
    %c5_i32_54 = arith.constant 5 : i32
    %130 = vector.broadcast %c5_i32_54 : i32 to vector<6x1xi32>
    %131 = arith.cmpi eq, %113, %130 : vector<6x1xi32>
    %cst_55 = arith.constant -1.000000e+00 : f32
    %132 = vector.broadcast %cst_55 : f32 to vector<6x1xf32>
    %133 = arith.select %131, %132, %129 : vector<6x1xi1>, vector<6x1xf32>
    %c0_56 = arith.constant 0 : index
    %c28 = arith.constant 28 : index
    %c0_57 = arith.constant 0 : index
    %134 = vector.load %arg4[%c0_56, %c28, %c0_57] : memref<1x34x128xf32, #tpu.memory_space<vmem>>, vector<1x6x128xf32>
    %135 = vector.shape_cast %134 : vector<1x6x128xf32> to vector<6x128xf32>
    %136 = vector.broadcast %133 : vector<6x1xf32> to vector<6x128xf32>
    %137 = arith.mulf %135, %136 : vector<6x128xf32>
    %138 = vector.broadcast %8 : vector<1x128xf32> to vector<6x128xf32>
    %139 = arith.mulf %137, %138 : vector<6x128xf32>
    %cst_58 = arith.constant 0.000000e+00 : f32
    %140 = vector.shape_cast %7 : vector<1x128xi1> to vector<1x128xi1>
    %141 = vector.broadcast %140 : vector<1x128xi1> to vector<6x128xi1>
    %142 = vector.broadcast %cst_58 : f32 to vector<6x128xf32>
    %143 = arith.select %141, %139, %142 : vector<6x128xi1>, vector<6x128xf32>
    %144 = vector.shape_cast %143 : vector<6x128xf32> to vector<1x6x128xf32>
    %cst_59 = arith.constant dense<0.000000e+00> : vector<1xf32>
    %145 = vector.multi_reduction <add>, %144, %cst_59 [1, 2] : vector<1x6x128xf32> to vector<1xf32>
    %146 = vector.shape_cast %145 : vector<1xf32> to vector<1x1x1xf32>
    %147 = vector.extract %146[0, 0, 0] : f32 from vector<1x1x1xf32>
    %148 = tpu.iota {dimensions = array<i32: 0>} : vector<8x128xi32>
    %c0_i32 = arith.constant 0 : i32
    %149 = vector.broadcast %c0_i32 : i32 to vector<8x128xi32>
    %150 = arith.cmpi eq, %148, %149 : vector<8x128xi32>
    %c1_i32_60 = arith.constant 1 : i32
    %151 = vector.broadcast %c1_i32_60 : i32 to vector<8x128xi32>
    %152 = arith.cmpi eq, %148, %151 : vector<8x128xi32>
    %c2_i32_61 = arith.constant 2 : i32
    %153 = vector.broadcast %c2_i32_61 : i32 to vector<8x128xi32>
    %154 = arith.cmpi eq, %148, %153 : vector<8x128xi32>
    %cst_62 = arith.constant 0.000000e+00 : f32
    %155 = vector.broadcast %147 : f32 to vector<8x128xf32>
    %156 = vector.broadcast %cst_62 : f32 to vector<8x128xf32>
    %157 = arith.select %154, %155, %156 : vector<8x128xi1>, vector<8x128xf32>
    %158 = vector.broadcast %111 : f32 to vector<8x128xf32>
    %159 = arith.select %152, %158, %157 : vector<8x128xi1>, vector<8x128xf32>
    %160 = vector.broadcast %102 : f32 to vector<8x128xf32>
    %161 = arith.select %150, %160, %159 : vector<8x128xi1>, vector<8x128xf32>
    %c0_i32_63 = arith.constant 0 : i32
    %162 = arith.cmpi eq, %arg2, %c0_i32_63 : i32
    %163 = arith.extui %162 : i1 to i32
    %c0_i32_64 = arith.constant 0 : i32
    %164 = arith.cmpi ne, %163, %c0_i32_64 : i32
    scf.if %164 {
      %cst_73 = arith.constant 0.000000e+00 : f32
      %171 = vector.broadcast %cst_73 : f32 to vector<8x128xf32>
      %c0_74 = arith.constant 0 : index
      %c0_75 = arith.constant 0 : index
      %c0_76 = arith.constant 0 : index
      %c0_77 = arith.constant 0 : index
      %172 = vector.load %arg7[%c0_74, %c0_75, %c0_76, %c0_77] : memref<1x1x8x128xf32, #tpu.memory_space<vmem>>, vector<1x1x8x128xf32>
      %173 = vector.shape_cast %172 : vector<1x1x8x128xf32> to vector<8x128xf32>
      %174 = vector.shape_cast %171 : vector<8x128xf32> to vector<1x1x8x128xf32>
      tpu.vector_store %arg7[%c0_74, %c0_75, %c0_76, %c0_77], %174 {strides = array<i32>} : memref<1x1x8x128xf32, #tpu.memory_space<vmem>>, vector<1x1x8x128xf32>,
    } else {
    }
    %c0_65 = arith.constant 0 : index
    %c0_66 = arith.constant 0 : index
    %c0_67 = arith.constant 0 : index
    %c0_68 = arith.constant 0 : index
    %165 = vector.load %arg7[%c0_65, %c0_66, %c0_67, %c0_68] : memref<1x1x8x128xf32, #tpu.memory_space<vmem>>, vector<1x1x8x128xf32>
    %166 = vector.shape_cast %165 : vector<1x1x8x128xf32> to vector<8x128xf32>
    %167 = arith.addf %166, %161 : vector<8x128xf32>
    %c0_69 = arith.constant 0 : index
    %c0_70 = arith.constant 0 : index
    %c0_71 = arith.constant 0 : index
    %c0_72 = arith.constant 0 : index
    %168 = vector.load %arg7[%c0_69, %c0_70, %c0_71, %c0_72] : memref<1x1x8x128xf32, #tpu.memory_space<vmem>>, vector<1x1x8x128xf32>
    %169 = vector.shape_cast %168 : vector<1x1x8x128xf32> to vector<8x128xf32>
    %170 = vector.shape_cast %167 : vector<8x128xf32> to vector<1x1x8x128xf32>
    tpu.vector_store %arg7[%c0_69, %c0_70, %c0_71, %c0_72], %170 {strides = array<i32>} : memref<1x1x8x128xf32, #tpu.memory_space<vmem>>, vector<1x1x8x128xf32>,
    return
  }
  func.func @transform_0(%arg0: i32, %arg1: i32, %arg2: i32) -> (i32, i32, i32) {
    %c2_i32 = arith.constant 2 : i32
    %0 = arith.muli %arg1, %c2_i32 : i32
    %1 = arith.addi %0, %arg2 : i32
    %c0_i32 = arith.constant 0 : i32
    %c0_i32_0 = arith.constant 0 : i32
    return %arg0, %c0_i32, %1 : i32, i32, i32
  }
  func.func @transform_1(%arg0: i32, %arg1: i32, %arg2: i32) -> (i32, i32, i32) {
    %c2_i32 = arith.constant 2 : i32
    %0 = arith.muli %arg1, %c2_i32 : i32
    %1 = arith.addi %0, %arg2 : i32
    %c0_i32 = arith.constant 0 : i32
    %c0_i32_0 = arith.constant 0 : i32
    return %arg0, %c0_i32, %1 : i32, i32, i32
  }
  func.func @transform_2(%arg0: i32, %arg1: i32, %arg2: i32) -> (i32, i32) {
    %c2_i32 = arith.constant 2 : i32
    %0 = arith.muli %arg1, %c2_i32 : i32
    %1 = arith.addi %0, %arg2 : i32
    %c0_i32 = arith.constant 0 : i32
    %c0_i32_0 = arith.constant 0 : i32
    return %c0_i32, %1 : i32, i32
  }
  func.func @transform_3(%arg0: i32, %arg1: i32, %arg2: i32) -> (i32, i32) {
    %c2_i32 = arith.constant 2 : i32
    %0 = arith.muli %arg1, %c2_i32 : i32
    %1 = arith.addi %0, %arg2 : i32
    %c0_i32 = arith.constant 0 : i32
    %c0_i32_0 = arith.constant 0 : i32
    return %c0_i32, %1 : i32, i32
  }
  func.func @transform_4(%arg0: i32, %arg1: i32, %arg2: i32) -> (i32, i32, i32, i32) {
    %c0_i32 = arith.constant 0 : i32
    %c0_i32_0 = arith.constant 0 : i32
    %c0_i32_1 = arith.constant 0 : i32
    return %arg0, %arg1, %c0_i32, %c0_i32_0 : i32, i32, i32, i32
  }
}

module attributes {stable_mosaic.version = 11 : i64} {
  func.func @_apply_ratio_kernel(%arg0: i32, %arg1: i32, %arg2: memref<2xf32, #tpu.memory_space<smem>>, %arg3: memref<1x32x128xf32, #tpu.memory_space<vmem>>, %arg4: memref<1x128xf32, #tpu.memory_space<vmem>>, %arg5: memref<1x8x128xf32, #tpu.memory_space<vmem>>) attributes {dimension_semantics = [#tpu.dimension_semantics<parallel>, #tpu.dimension_semantics<parallel>], iteration_bounds = array<i64: 2, 2>, scalar_prefetch = 0 : i64, scratch_operands = 0 : i64, tpu.core_type = #tpu.core_type<tc>, window_params = [{transform_indices = @transform_0, window_bounds = array<i64: 2>}, {transform_indices = @transform_1, window_bounds = array<i64: 1, 32, 128>}, {transform_indices = @transform_2, window_bounds = array<i64: 1, 128>}, {transform_indices = @transform_3, window_bounds = array<i64: 1, 8, 128>}]} {
    %0 = arith.index_cast %arg0 : i32 to index
    %1 = memref.load %arg2[%0] : memref<2xf32, #tpu.memory_space<smem>>
    %c0 = arith.constant 0 : index
    %c0_0 = arith.constant 0 : index
    %2 = vector.load %arg4[%c0, %c0_0] : memref<1x128xf32, #tpu.memory_space<vmem>>, vector<1x128xf32>
    %c0_1 = arith.constant 0 : index
    %c0_2 = arith.constant 0 : index
    %c0_3 = arith.constant 0 : index
    %3 = vector.load %arg3[%c0_1, %c0_2, %c0_3] : memref<1x32x128xf32, #tpu.memory_space<vmem>>, vector<1x7x128xf32>
    %4 = vector.shape_cast %3 : vector<1x7x128xf32> to vector<7x128xf32>
    %c0_4 = arith.constant 0 : index
    %c7 = arith.constant 7 : index
    %c0_5 = arith.constant 0 : index
    %5 = vector.load %arg3[%c0_4, %c7, %c0_5] : memref<1x32x128xf32, #tpu.memory_space<vmem>>, vector<1x7x128xf32>
    %6 = vector.shape_cast %5 : vector<1x7x128xf32> to vector<7x128xf32>
    %c0_6 = arith.constant 0 : index
    %c14 = arith.constant 14 : index
    %c0_7 = arith.constant 0 : index
    %7 = vector.load %arg3[%c0_6, %c14, %c0_7] : memref<1x32x128xf32, #tpu.memory_space<vmem>>, vector<1x7x128xf32>
    %8 = vector.shape_cast %7 : vector<1x7x128xf32> to vector<7x128xf32>
    %c0_8 = arith.constant 0 : index
    %c21 = arith.constant 21 : index
    %c0_9 = arith.constant 0 : index
    %9 = vector.load %arg3[%c0_8, %c21, %c0_9] : memref<1x32x128xf32, #tpu.memory_space<vmem>>, vector<1x7x128xf32>
    %10 = vector.shape_cast %9 : vector<1x7x128xf32> to vector<7x128xf32>
    %cst = arith.constant 1.000000e+00 : f32
    %11 = vector.broadcast %cst : f32 to vector<7x128xf32>
    %12 = arith.subf %11, %6 : vector<7x128xf32>
    %cst_10 = arith.constant 1.005000e+03 : f32
    %13 = vector.broadcast %cst_10 : f32 to vector<7x128xf32>
    %14 = arith.mulf %12, %13 : vector<7x128xf32>
    %cst_11 = arith.constant 1.846000e+03 : f32
    %15 = vector.broadcast %cst_11 : f32 to vector<7x128xf32>
    %16 = arith.mulf %6, %15 : vector<7x128xf32>
    %17 = arith.addf %14, %16 : vector<7x128xf32>
    %cst_12 = arith.constant 2.260000e+06 : f32
    %18 = vector.broadcast %cst_12 : f32 to vector<7x128xf32>
    %19 = arith.mulf %18, %6 : vector<7x128xf32>
    %20 = vector.broadcast %2 : vector<1x128xf32> to vector<7x128xf32>
    %21 = arith.addf %19, %20 : vector<7x128xf32>
    %22 = arith.mulf %8, %8 : vector<7x128xf32>
    %23 = arith.mulf %10, %10 : vector<7x128xf32>
    %24 = arith.addf %22, %23 : vector<7x128xf32>
    %cst_13 = arith.constant 5.000000e-01 : f32
    %25 = vector.broadcast %cst_13 : f32 to vector<7x128xf32>
    %26 = arith.mulf %25, %24 : vector<7x128xf32>
    %27 = arith.addf %21, %26 : vector<7x128xf32>
    %28 = arith.mulf %17, %4 : vector<7x128xf32>
    %29 = arith.addf %28, %27 : vector<7x128xf32>
    %30 = vector.broadcast %1 : f32 to vector<7x128xf32>
    %31 = arith.mulf %29, %30 : vector<7x128xf32>
    %32 = arith.subf %31, %27 : vector<7x128xf32>
    %33 = tpu.reciprocal %17 : vector<7x128xf32> -> vector<7x128xf32>
    %34 = arith.mulf %32, %33 : vector<7x128xf32>
    %c0_14 = arith.constant 0 : index
    %c0_15 = arith.constant 0 : index
    %c0_16 = arith.constant 0 : index
    %35 = vector.load %arg5[%c0_14, %c0_15, %c0_16] : memref<1x8x128xf32, #tpu.memory_space<vmem>>, vector<1x7x128xf32>
    %36 = vector.shape_cast %35 : vector<1x7x128xf32> to vector<7x128xf32>
    %37 = vector.shape_cast %34 : vector<7x128xf32> to vector<1x7x128xf32>
    tpu.vector_store %arg5[%c0_14, %c0_15, %c0_16], %37 {strides = array<i32>} : memref<1x8x128xf32, #tpu.memory_space<vmem>>, vector<1x7x128xf32>,
    %c0_17 = arith.constant 0 : index
    %c7_18 = arith.constant 7 : index
    %c0_19 = arith.constant 0 : index
    %38 = vector.load %arg3[%c0_17, %c7_18, %c0_19] : memref<1x32x128xf32, #tpu.memory_space<vmem>>, vector<1x1x128xf32>
    %39 = vector.shape_cast %38 : vector<1x1x128xf32> to vector<1x128xf32>
    %c0_20 = arith.constant 0 : index
    %c7_21 = arith.constant 7 : index
    %c0_22 = arith.constant 0 : index
    %40 = vector.load %arg5[%c0_20, %c7_21, %c0_22] : memref<1x8x128xf32, #tpu.memory_space<vmem>>, vector<1x1x128xf32>
    %41 = vector.shape_cast %40 : vector<1x1x128xf32> to vector<1x128xf32>
    %42 = vector.shape_cast %39 : vector<1x128xf32> to vector<1x1x128xf32>
    tpu.vector_store %arg5[%c0_20, %c7_21, %c0_22], %42 {strides = array<i32>} : memref<1x8x128xf32, #tpu.memory_space<vmem>>, vector<1x1x128xf32>,
    return
  }
  func.func @transform_0(%arg0: i32, %arg1: i32) -> i32 {
    %c0_i32 = arith.constant 0 : i32
    %c0_i32_0 = arith.constant 0 : i32
    return %c0_i32 : i32
  }
  func.func @transform_1(%arg0: i32, %arg1: i32) -> (i32, i32, i32) {
    %c0_i32 = arith.constant 0 : i32
    %c0_i32_0 = arith.constant 0 : i32
    return %arg0, %c0_i32, %arg1 : i32, i32, i32
  }
  func.func @transform_2(%arg0: i32, %arg1: i32) -> (i32, i32) {
    %c0_i32 = arith.constant 0 : i32
    %c0_i32_0 = arith.constant 0 : i32
    return %c0_i32, %arg1 : i32, i32
  }
  func.func @transform_3(%arg0: i32, %arg1: i32) -> (i32, i32, i32) {
    %c0_i32 = arith.constant 0 : i32
    %c0_i32_0 = arith.constant 0 : i32
    return %arg0, %c0_i32, %arg1 : i32, i32, i32
  }
}

</mosaic_0001>

<llo_original>
// kernel: _forward_impl.3
$region0: #{_forward_impl.3}
  #allocation0 [shape = 'u32[]', space=smem, size = 0x4, offset = 0x4, fixed_abs, tag = 'smem constant byte address 0x4 - core index']
  #allocation1 [shape = 'u32[72,128]{1,0:T(1,128)}', space=vmem, size = 0x9000, scoped, tag = 'internal scratch']
  %s0 = inlined_call_operand.vmem [shape: f32[2], index: 0, kind: input, shape index: {}]
  %s1 = inlined_call_operand.vmem [shape: f32[2,34,180], index: 1, kind: input, shape index: {}, may-alias: {1,3}]
  %s2 = inlined_call_operand.vmem [shape: f32[1,256], index: 2, kind: input, shape index: {}]
  %s3 = inlined_call_operand.vmem [shape: f32[2,34,180], index: 3, kind: output, shape index: {}, may-alias: {1,3}]
  %s4 = sld [smem:[#allocation0]]
  $region87: #{_forward_impl.3} parent=0
    _
  %s6 = ssub.s32 1, %s4
  %s7 = scalar_select 0, %s6, %s4
  $region1: #{_forward_impl.3} parent=0
    #allocation2 [shape = 'u8[512]{0}', space=smem, size = 0x200, scoped, tag = 'input window, operand 0, single buffered']
    #allocation3 [shape = 's32[2]{0}', space=sflag, size = 0x8, scoped, tag = 'scoped memory for _forward_impl.3']
    #allocation4 [shape = 'u8[32768]{0}', space=vmem, size = 0x8000, scoped, tag = 'input window, operand 1']
    %8 = vsyncpa [#allocation3], 0
    loop: start=0, step=1, limit=6
    $region2: #{_forward_impl.3} parent=1 // loop_pre_header
      _
    $region3: #{_forward_impl.3} parent=1 // loop_header
      %s10 = sphi 0, %s14
      %p11 = scmp.ge.s32.totalorder %s10, 6
      %s17 = sphi 0, %s29
      %s18 = sphi 0, %s25
      %s19 = sphi 0, %s17
      %s20 = sphi 0, %s18
      %s21 = sphi 0, %s19
      %s22 = sphi 0, %s20
      %s30 = sphi 0, %s30
      %s32 = sphi 0, %s30
      %s33 = sphi 0, %s32
      %s47 = sphi 0, %s33
      %s55 = sphi 0, %s57
      %s58 = sphi 0, %s55
      %s59 = sphi 0, %s58
      %s75 = sphi 0, %s59
      %s81 = sphi 0, %s83
      %s84 = sphi 0, %s81
      %s85 = sphi 0, %s84
      %s101 = sphi 0, %s85
      %s109 = sphi 0, %s111
      %s112 = sphi 0, %s109
      %s113 = sphi 0, %s112
      %s129 = sphi 0, %s113
    $region4: #{_forward_impl.3} parent=1 // loop_header_branch
      %13 = sbr.rel (%p11) target = $region8
    $region5: #{_forward_impl.3} parent=1 // loop_body
      %s15 = ssub.s32 %s10, 1
      %s16 = ssub.s32 %s10, 2
      %s23 = sadd.s32 1, %s18
      %p24 = scmp.ge.s32.totalorder %s23, 2
      %s25 = scalar_select %p24, 0, %s23
      %s26 = sadd.s32 1, %s17
      %s27 = scalar_select %p24, %s26, %s17
      %p28 = scmp.ge.s32.totalorder %s27, 2
      %s29 = scalar_select %p28, 0, %s27
      %s31 = sadd.s32 %s30, 1
      %p34 = scmp.eq.s32.totalorder %s10, 3
      %p35 = scmp.ne.s32.totalorder %s30, %s32
      %p36 = scmp.eq.s32.totalorder %s10, 0
      %p37 = por %p35, %p36
      %p38 = scmp.ne.s32.totalorder %s30, %s32
      %p39 = scmp.eq.s32.totalorder %s15, 3
      %p40 = por %p38, %p39
      %p41 = scmp.ne.s32.totalorder %s32, %s33
      %p42 = scmp.eq.s32.totalorder %s15, 0
      %p43 = por %p41, %p42
      %p44 = scmp.ne.s32.totalorder %s32, %s33
      %p45 = scmp.eq.s32.totalorder %s16, 3
      %p46 = por %p44, %p45
      %p48 = scmp.ne.s32.totalorder %s33, %s47
      %p49 = scmp.eq.s32.totalorder %s16, 0
      %p50 = por %p48, %p49
      %s51 = ssub.s32 %s17, %s29
      %s52 = ssub.s32 %s18, %s25
      %s53 = sor.u32 %s51, %s52
      %p54 = scmp.eq.s32.totalorder %s53, 0
      %s56 = sadd.s32 %s55, 1
      %s57 = scalar_select %p54, %s55, %s56
      %p60 = pneg %p54
      %p61 = scmp.eq.s32.totalorder %s10, 3
      %p62 = por %p60, %p61
      %p63 = scmp.ne.s32.totalorder %s55, %s58
      %p64 = scmp.eq.s32.totalorder %s10, 0
      %p65 = por %p63, %p64
      %p66 = scmp.ne.s32.totalorder %s55, %s58
      %p67 = scmp.eq.s32.totalorder %s15, 3
      %p68 = por %p66, %p67
      %p69 = scmp.ne.s32.totalorder %s58, %s59
      %p70 = scmp.eq.s32.totalorder %s15, 0
      %p71 = por %p69, %p70
      %p72 = scmp.ne.s32.totalorder %s58, %s59
      %p73 = scmp.eq.s32.totalorder %s16, 3
      %p74 = por %p72, %p73
      %p76 = scmp.ne.s32.totalorder %s59, %s75
      %p77 = scmp.eq.s32.totalorder %s16, 0
      %p78 = por %p76, %p77
      %s79 = ssub.s32 %s18, %s25
      %p80 = scmp.eq.s32.totalorder %s79, 0
      %s82 = sadd.s32 %s81, 1
      %s83 = scalar_select %p80, %s81, %s82
      %p86 = pneg %p80
      %p87 = scmp.eq.s32.totalorder %s10, 3
      %p88 = por %p86, %p87
      %p89 = scmp.ne.s32.totalorder %s81, %s84
      %p90 = scmp.eq.s32.totalorder %s10, 0
      %p91 = por %p89, %p90
      %p92 = scmp.ne.s32.totalorder %s81, %s84
      %p93 = scmp.eq.s32.totalorder %s15, 3
      %p94 = por %p92, %p93
      %p95 = scmp.ne.s32.totalorder %s84, %s85
      %p96 = scmp.eq.s32.totalorder %s15, 0
      %p97 = por %p95, %p96
      %p98 = scmp.ne.s32.totalorder %s84, %s85
      %p99 = scmp.eq.s32.totalorder %s16, 3
      %p100 = por %p98, %p99
      %p102 = scmp.ne.s32.totalorder %s85, %s101
      %p103 = scmp.eq.s32.totalorder %s16, 0
      %p104 = por %p102, %p103
      %s105 = ssub.s32 %s17, %s29
      %s106 = ssub.s32 %s18, %s25
      %s107 = sor.u32 %s105, %s106
      %p108 = scmp.eq.s32.totalorder %s107, 0
      %s110 = sadd.s32 %s109, 1
      %s111 = scalar_select %p108, %s109, %s110
      %p114 = pneg %p108
      %p115 = scmp.eq.s32.totalorder %s10, 3
      %p116 = por %p114, %p115
      %p117 = scmp.ne.s32.totalorder %s109, %s112
      %p118 = scmp.eq.s32.totalorder %s10, 0
      %p119 = por %p117, %p118
      %p120 = scmp.ne.s32.totalorder %s109, %s112
      %p121 = scmp.eq.s32.totalorder %s15, 3
      %p122 = por %p120, %p121
      %p123 = scmp.ne.s32.totalorder %s112, %s113
      %p124 = scmp.eq.s32.totalorder %s15, 0
      %p125 = por %p123, %p124
      %p126 = scmp.ne.s32.totalorder %s112, %s113
      %p127 = scmp.eq.s32.totalorder %s16, 3
      %p128 = por %p126, %p127
      %p130 = scmp.ne.s32.totalorder %s113, %s129
      %p131 = scmp.eq.s32.totalorder %s16, 0
      %p132 = por %p130, %p131
      %p133 = scmp.le.s32.totalorder 1, %s10
      %p134 = scmp.lt.s32.totalorder %s10, 5
      %p135 = pnand %p133, %p134
      %p136 = pneg %p135
      // Predicated region
      $region9: #{_forward_impl.3} parent=5 // pred_check
        _
      $region10: #{_forward_impl.3} parent=5 // pred_check_branch
        %138 = sbr.rel (%p135) target = $region12
      $region11: #{_forward_impl.3} parent=5 // pred_region
        %s139 = ssub.s32 %s10, 1
        // Predicated region
        $region13: #{_forward_impl.3} parent=11 // pred_check
          %p140 = pneg %p43
        $region14: #{_forward_impl.3} parent=11 // pred_check_branch
          %142 = sbr.rel (%p140) target = $region16
        $region15: #{_forward_impl.3} parent=11 // pred_region
          %144 = vsyncadd [#allocation3], 0
          %s146 = sshll.u32 %s0, 4
          %s147 = int_to_ptr.vmem [resolvable:$true] %s146
          %149 = dma.vmem_to_smem %s147, 16, [#allocation2], [#allocation3]
        $region16: #{_forward_impl.3} parent=11 // pred_fallthru
          _
      $region12: #{_forward_impl.3} parent=5 // pred_fallthru
        _
      %p150 = scmp.lt.s32.totalorder %s10, 4
      // Predicated region
      $region17: #{_forward_impl.3} parent=5 // pred_check
        %p151 = pneg %p150
      $region18: #{_forward_impl.3} parent=5 // pred_check_branch
        %153 = sbr.rel (%p151) target = $region20
      $region19: #{_forward_impl.3} parent=5 // pred_region
        // Predicated region
        $region21: #{_forward_impl.3} parent=19 // pred_check
          %p154 = pneg %p65
        $region22: #{_forward_impl.3} parent=19 // pred_check_branch
          %156 = sbr.rel (%p154) target = $region24
        $region23: #{_forward_impl.3} parent=19 // pred_region
          %s157 = sand.u32 %s55, 1
          %s158 = sand.u32 %s55, 1
          %s159 = smul.addr %s158, 32
          %s160 = scalar_lea.vmem [#allocation4], %s159
          %s161 = smul.addr %s17, 10
          %s162 = sadd.s32 %s18, %s161
          %s163 = smul.addr %s162, 8
          %s164 = scalar_lea.vmem %s1, %s163
          // Predicated region
          $region25: #{_forward_impl.3} parent=23 // pred_check
            _
          $region26: #{_forward_impl.3} parent=23 // pred_check_branch
            %166 = sbr.rel (0) target = $region28
          $region27: #{_forward_impl.3} parent=23 // pred_region
            // Predicated region
            $region29: #{_forward_impl.3} parent=27 // pred_check
              _
            $region30: #{_forward_impl.3} parent=27 // pred_check_branch
              %168 = sbr.rel (0) target = $region32
            $region31: #{_forward_impl.3} parent=27 // pred_region
              // Predicated region
              $region44: #{_forward_impl.3} parent=31 // pred_check
                _
              $region45: #{_forward_impl.3} parent=31 // pred_check_branch
                %190 = sbr.rel (0) target = $region47
              $region46: #{_forward_impl.3} parent=31 // pred_region
                loop: start=0, step=1, limit=1
                $region48: #{_forward_impl.3} parent=46 // loop_pre_header
                  _
                $region49: #{_forward_impl.3} parent=46 // loop_header
                  %s192 = sphi 0, %s196
                  %p193 = scmp.ge.s32.totalorder %s192, 1
                  %s197 = sphi %s164, %s164
                  %s198 = sphi %s160, %s160
                $region50: #{_forward_impl.3} parent=46 // loop_header_branch
                  %195 = sbr.rel (%p193) target = $region54
                $region51: #{_forward_impl.3} parent=46 // loop_body
                  %v199 = vld [vmem:[%s197] sm:$0xff]
                  %200 = vst [vmem:[%s198] sm:$0xff] %v199
                  %v201 = vld [vmem:[%s197 + $0x10] sm:$0xff]
                  %202 = vst [vmem:[%s198 + $0x8] sm:$0xff] %v201
                  %v203 = vld [vmem:[%s197 + $0x20] sm:$0xff]
                  %204 = vst [vmem:[%s198 + $0x10] sm:$0xff] %v203
                  %v205 = vld [vmem:[%s197 + $0x30] sm:$0xff]
                  %206 = vst [vmem:[%s198 + $0x18] sm:$0xff] %v205
                $region52: #{_forward_impl.3} parent=46 // loop_footer
                  %s196 = sadd.s32 1, %s192
                $region53: #{_forward_impl.3} parent=46 // loop_footer_branch
                  %191 = sbr.rel target = $region49
                $region54: #{_forward_impl.3} parent=46 // loop_exit
                  _
              $region47: #{_forward_impl.3} parent=31 // pred_fallthru
                _
              // Predicated region
              $region55: #{_forward_impl.3} parent=31 // pred_check
                _
              $region56: #{_forward_impl.3} parent=31 // pred_check_branch
                %208 = sbr.rel target = $region58
              $region57: #{_forward_impl.3} parent=31 // pred_region
                _
              $region58: #{_forward_impl.3} parent=31 // pred_fallthru
                _
            $region32: #{_forward_impl.3} parent=27 // pred_fallthru
              _
            // Predicated region
            $region33: #{_forward_impl.3} parent=27 // pred_check
              _
            $region34: #{_forward_impl.3} parent=27 // pred_check_branch
              %170 = sbr.rel target = $region36
            $region35: #{_forward_impl.3} parent=27 // pred_region
              %s172 = ssub.s32 256, 1
              loop: start=0, step=1, limit=1
              $region37: #{_forward_impl.3} parent=35 // loop_pre_header
                _
              $region38: #{_forward_impl.3} parent=35 // loop_header
                %s174 = sphi 0, %s178
                %p175 = scmp.ge.s32.totalorder %s174, 1
                %s179 = sphi %s164, %s164
                %s180 = sphi %s160, %s160
              $region39: #{_forward_impl.3} parent=35 // loop_header_branch
                %177 = sbr.rel (%p175) target = $region43
              $region40: #{_forward_impl.3} parent=35 // loop_body
                %v181 = vld [vmem:[%s179] sm:%s172]
                %182 = vst [vmem:[%s180] sm:%s172] %v181
                %v183 = vld [vmem:[%s179 + $0x10] sm:%s172]
                %184 = vst [vmem:[%s180 + $0x8] sm:%s172] %v183
                %v185 = vld [vmem:[%s179 + $0x20] sm:%s172]
                %186 = vst [vmem:[%s180 + $0x10] sm:%s172] %v185
                %v187 = vld [vmem:[%s179 + $0x30] sm:%s172]
                %188 = vst [vmem:[%s180 + $0x18] sm:%s172] %v187
              $region41: #{_forward_impl.3} parent=35 // loop_footer
                %s178 = sadd.s32 1, %s174
              $region42: #{_forward_impl.3} parent=35 // loop_footer_branch
                %173 = sbr.rel target = $region38
              $region43: #{_forward_impl.3} parent=35 // loop_exit
                _
            $region36: #{_forward_impl.3} parent=27 // pred_fallthru
              _
          $region28: #{_forward_impl.3} parent=23 // pred_fallthru
            _
          %209 = vnop
        $region24: #{_forward_impl.3} parent=19 // pred_fallthru
          _
        // Predicated region
        $region59: #{_forward_impl.3} parent=19 // pred_check
          %p210 = pneg %p91
        $region60: #{_forward_impl.3} parent=19 // pred_check_branch
          %212 = sbr.rel (%p210) target = $region62
        $region61: #{_forward_impl.3} parent=19 // pred_region
          %p213 = scmp.lt.s32.totalorder %s18, 1
          %s214 = scalar_select %p213, %s18, 1
          %s215 = scalar_lea.vmem %s2, %s214
        $region62: #{_forward_impl.3} parent=19 // pred_fallthru
          _
      $region20: #{_forward_impl.3} parent=5 // pred_fallthru
        _
      %p216 = scmp.le.s32.totalorder 1, %s10
      %p217 = scmp.lt.s32.totalorder %s10, 5
      %p218 = pnand %p216, %p217
      %p219 = pneg %p218
      // Predicated region
      $region63: #{_forward_impl.3} parent=5 // pred_check
        _
      $region64: #{_forward_impl.3} parent=5 // pred_check_branch
        %221 = sbr.rel (%p218) target = $region66
      $region65: #{_forward_impl.3} parent=5 // pred_region
        %s222 = ssub.s32 %s10, 1
        // Predicated region
        $region67: #{_forward_impl.3} parent=65 // pred_check
          %p223 = pneg %p43
        $region68: #{_forward_impl.3} parent=65 // pred_check_branch
          %225 = sbr.rel (%p223) target = $region70
        $region69: #{_forward_impl.3} parent=65 // pred_region
          %227 = dma.done [#allocation3], 16
        $region70: #{_forward_impl.3} parent=65 // pred_fallthru
          _
        %s228 = sand.u32 %s58, 1
        %s229 = sand.u32 %s58, 1
        %s230 = smul.addr %s229, 32
        %s231 = scalar_lea.vmem [#allocation4], %s230
        // Predicated region
        $region71: #{_forward_impl.3} parent=65 // pred_check
          %p232 = pneg %p71
        $region72: #{_forward_impl.3} parent=65 // pred_check_branch
          %234 = sbr.rel (%p232) target = $region74
        $region73: #{_forward_impl.3} parent=65 // pred_region
          _
        $region74: #{_forward_impl.3} parent=65 // pred_fallthru
          _
        %235 = sfence
        %p236 = pneg %p43
        %p237 = pneg %p40
        %s238 = sand.u32 %s58, 1
        %s239 = sand.u32 %s58, 1
        %s240 = smul.addr %s239, 32
        %s241 = scalar_lea.vmem [#allocation4], %s240
        %p242 = pneg %p71
        %p243 = pneg %p68
        %p244 = scmp.lt.s32.totalorder %s20, 1
        %s245 = scalar_select %p244, %s20, 1
        %s246 = scalar_lea.vmem %s2, %s245
        %p247 = pneg %p97
        %p248 = pneg %p94
        %p249 = pneg %p125
        %p250 = pneg %p122
        %p251 = scmp.lt.s32.totalorder %s19, 1
        %s252 = scalar_select %p251, %s19, 1
        %p253 = scmp.lt.s32.totalorder %s20, 1
        %s254 = scalar_select %p253, %s20, 1
        %s255 = smul.addr %s252, 10
        %s256 = sadd.s32 %s254, %s255
        %s257 = smul.addr %s256, 8
        %s258 = scalar_lea.vmem %s3, %s257
        %p259 = scmp.lt.s32.totalorder %s20, 1
        %s260 = scalar_select %p259, %s20, 1
        %s261 = scalar_lea.vmem %s2, %s260
        %p262 = scmp.lt.s32.totalorder %s19, 1
        %s263 = scalar_select %p262, %s19, 1
        %p264 = scmp.lt.s32.totalorder %s20, 1
        %s265 = scalar_select %p264, %s20, 1
        %s266 = smul.addr %s263, 10
        %s267 = sadd.s32 %s265, %s266
        %s268 = smul.addr %s267, 8
        %s269 = scalar_lea.vmem %s3, %s268
        %s270 = sld [smem:[#allocation2 + %s19]]
        %v271 = vld [vmem:[%s261] sm:$0x1]
        %v272 = vld [vmem:[%s231] sm:$0x7f]
        %v273 = vld [vmem:[%s231 + $0x7] sm:$0x7f]
        %v274 = vld [vmem:[%s231 + $0xe] sm:$0x7f]
        %v275 = vld [vmem:[%s231 + $0x15] sm:$0x7f]
        %v276 = vsub.f32 1.0, %v273
        %v277 = vmul.f32 %v276, 1005.0
        %v278 = vmul.f32 %v273, 1846.0
        %v279 = vadd.f32 %v277, %v278
        %v280 = vmul.f32 %v273, 2260000.0
        %v282 = vperm.slane %v271, 0
        %v284 = vadd.f32 %v280, %v282
        %v285 = vmul.f32 %v274, %v274
        %v286 = vmul.f32 %v275, %v275
        %v287 = vadd.f32 %v285, %v286
        %v288 = vmul.f32 %v287, 0.5
        %v289 = vadd.f32 %v284, %v288
        %v290 = vmul.f32 %v279, %v272
        %v291 = vadd.f32 %v290, %v289
        %v292 = vstv %s270
        %v293 = vmul.f32 %v291, %v292
        %v294 = vsub.f32 %v293, %v289
        %v295 = vrcp.pop %v279
        %v296 = vmul.f32 %v279, %v295
        %v297 = vsub.f32 1.0, %v296
        %v298 = vmul.f32 %v295, %v297
        %v299 = vadd.f32 %v295, %v298
        %vm300 = vweird.f32 %v279
        %vm301 = vweird.f32 %v295
        %vm302 = vmor %vm300, %vm301
        %v303 = vsel %vm302, %v295, %v299
        %v304 = vand.u32 2147483647, %v279
        %vm305 = vcmp.eq.f32.partialorder %v304, 8.507059e+37
        %v306 = vand.u32 %v279, 2147483648
        %v307 = vor.u32 1.1754944e-38, %v306
        %v308 = vsel %vm305, %v307, %v303
        %v309 = vmul.f32 %v294, %v308
        %310 = vst [vmem:[%s269] sm:$0x7f] %v309
        %v311 = vld [vmem:[%s231 + $0x7] sm:$0x1]
        %312 = vst [vmem:[%s269 + $0x7] sm:$0x1] %v311
        %p313 = scmp.lt.s32.totalorder %s19, 1
        %s314 = scalar_select %p313, %s19, 1
        %p315 = scmp.lt.s32.totalorder %s20, 1
        %s316 = scalar_select %p315, %s20, 1
        %s317 = smul.addr %s314, 10
        %s318 = sadd.s32 %s316, %s317
        %s319 = smul.addr %s318, 8
        %s320 = scalar_lea.vmem %s3, %s319
        // Predicated region
        $region75: #{_forward_impl.3} parent=65 // pred_check
          %p321 = pneg %p122
        $region76: #{_forward_impl.3} parent=65 // pred_check_branch
          %323 = sbr.rel (%p321) target = $region78
        $region77: #{_forward_impl.3} parent=65 // pred_region
          _
        $region78: #{_forward_impl.3} parent=65 // pred_fallthru
          _
      $region66: #{_forward_impl.3} parent=5 // pred_fallthru
        _
      %p324 = scmp.le.s32.totalorder 2, %s10
      // Predicated region
      $region79: #{_forward_impl.3} parent=5 // pred_check
        %p325 = pneg %p324
      $region80: #{_forward_impl.3} parent=5 // pred_check_branch
        %327 = sbr.rel (%p325) target = $region82
      $region81: #{_forward_impl.3} parent=5 // pred_region
        %s328 = ssub.s32 %s10, 2
        // Predicated region
        $region83: #{_forward_impl.3} parent=81 // pred_check
          %p329 = pneg %p128
        $region84: #{_forward_impl.3} parent=81 // pred_check_branch
          %331 = sbr.rel (%p329) target = $region86
        $region85: #{_forward_impl.3} parent=81 // pred_region
          %p332 = scmp.lt.s32.totalorder %s21, 1
          %s333 = scalar_select %p332, %s21, 1
          %p334 = scmp.lt.s32.totalorder %s22, 1
          %s335 = scalar_select %p334, %s22, 1
          %s336 = smul.addr %s333, 10
          %s337 = sadd.s32 %s335, %s336
          %s338 = smul.addr %s337, 8
          %s339 = scalar_lea.vmem %s3, %s338
        $region86: #{_forward_impl.3} parent=81 // pred_fallthru
          _
      $region82: #{_forward_impl.3} parent=5 // pred_fallthru
        _
    $region6: #{_forward_impl.3} parent=1 // loop_footer
      %s14 = sadd.s32 1, %s10
    $region7: #{_forward_impl.3} parent=1 // loop_footer_branch
      %9 = sbr.rel target = $region3
    $region8: #{_forward_impl.3} parent=1 // loop_exit
      _
    %340 = vsyncpa [#allocation3], 1
    %s341 = scalar_lea.sflag [#allocation3], 1
    %342 = vsyncpa %s341, 1

// kernel: _forward_impl.2
$region0: #{_forward_impl.2}
  #allocation0 [shape = 'u32[]', space=smem, size = 0x4, offset = 0x4, fixed_abs, tag = 'smem constant byte address 0x4 - core index']
  #allocation1 [shape = 'u32[72,128]{1,0:T(1,128)}', space=vmem, size = 0x9000, scoped, tag = 'internal scratch']
  %s0 = inlined_call_operand.vmem [shape: f32[2,28,180], index: 0, kind: input, shape index: {}]
  %s1 = inlined_call_operand.vmem [shape: f32[2,34,180], index: 1, kind: input, shape index: {}]
  %s2 = inlined_call_operand.vmem [shape: f32[1,256], index: 2, kind: input, shape index: {}]
  %s3 = inlined_call_operand.vmem [shape: f32[1,256], index: 3, kind: input, shape index: {}]
  %s4 = inlined_call_operand.vmem [shape: f32[2,1,8,128], index: 4, kind: output, shape index: {}]
  %s5 = sld [smem:[#allocation0]]
  $region129: #{_forward_impl.2} parent=0
    _
  %s7 = ssub.s32 1, %s5
  %s8 = scalar_select 0, %s7, %s5
  $region1: #{_forward_impl.2} parent=0
    #allocation2 [shape = 'u8[32768]{0}', space=vmem, size = 0x8000, scoped, tag = 'input window, operand 0']
    #allocation3 [shape = 'u8[40960]{0}', space=vmem, size = 0xa000, scoped, tag = 'input window, operand 1']
    loop: start=0, step=1, limit=6
    $region2: #{_forward_impl.2} parent=1 // loop_pre_header
      _
    $region3: #{_forward_impl.2} parent=1 // loop_header
      %s10 = sphi 0, %s14
      %p11 = scmp.ge.s32.totalorder %s10, 6
      %s17 = sphi 0, %s36
      %s18 = sphi 0, %s32
      %s19 = sphi 0, %s28
      %s20 = sphi 0, %s17
      %s21 = sphi 0, %s18
      %s22 = sphi 0, %s19
      %s23 = sphi 0, %s20
      %s24 = sphi 0, %s21
      %s25 = sphi 0, %s22
      %s45 = sphi 0, %s47
      %s48 = sphi 0, %s45
      %s49 = sphi 0, %s48
      %s65 = sphi 0, %s49
      %s77 = sphi 0, %s79
      %s80 = sphi 0, %s77
      %s81 = sphi 0, %s80
      %s97 = sphi 0, %s81
      %s107 = sphi 0, %s109
      %s110 = sphi 0, %s107
      %s111 = sphi 0, %s110
      %s127 = sphi 0, %s111
      %s137 = sphi 0, %s139
      %s140 = sphi 0, %s137
      %s141 = sphi 0, %s140
      %s157 = sphi 0, %s141
      %s165 = sphi 0, %s167
      %s168 = sphi 0, %s165
      %s169 = sphi 0, %s168
      %s185 = sphi 0, %s169
    $region4: #{_forward_impl.2} parent=1 // loop_header_branch
      %13 = sbr.rel (%p11) target = $region8
    $region5: #{_forward_impl.2} parent=1 // loop_body
      %s15 = ssub.s32 %s10, 1
      %s16 = ssub.s32 %s10, 2
      %s26 = sadd.s32 1, %s19
      %p27 = scmp.ge.s32.totalorder %s26, 2
      %s28 = scalar_select %p27, 0, %s26
      %s29 = sadd.s32 1, %s18
      %s30 = scalar_select %p27, %s29, %s18
      %p31 = scmp.ge.s32.totalorder %s30, 1
      %s32 = scalar_select %p31, 0, %s30
      %s33 = sadd.s32 1, %s17
      %s34 = scalar_select %p31, %s33, %s17
      %p35 = scmp.ge.s32.totalorder %s34, 2
      %s36 = scalar_select %p35, 0, %s34
      %s37 = smul.u32 %s18, 2
      %s38 = sadd.s32 %s37, %s19
      %s39 = smul.u32 %s32, 2
      %s40 = sadd.s32 %s39, %s28
      %s41 = ssub.s32 %s17, %s36
      %s42 = ssub.s32 %s38, %s40
      %s43 = sor.u32 %s41, %s42
      %p44 = scmp.eq.s32.totalorder %s43, 0
      %s46 = sadd.s32 %s45, 1
      %s47 = scalar_select %p44, %s45, %s46
      %p50 = pneg %p44
      %p51 = scmp.eq.s32.totalorder %s10, 3
      %p52 = por %p50, %p51
      %p53 = scmp.ne.s32.totalorder %s45, %s48
      %p54 = scmp.eq.s32.totalorder %s10, 0
      %p55 = por %p53, %p54
      %p56 = scmp.ne.s32.totalorder %s45, %s48
      %p57 = scmp.eq.s32.totalorder %s15, 3
      %p58 = por %p56, %p57
      %p59 = scmp.ne.s32.totalorder %s48, %s49
      %p60 = scmp.eq.s32.totalorder %s15, 0
      %p61 = por %p59, %p60
      %p62 = scmp.ne.s32.totalorder %s48, %s49
      %p63 = scmp.eq.s32.totalorder %s16, 3
      %p64 = por %p62, %p63
      %p66 = scmp.ne.s32.totalorder %s49, %s65
      %p67 = scmp.eq.s32.totalorder %s16, 0
      %p68 = por %p66, %p67
      %s69 = smul.u32 %s18, 2
      %s70 = sadd.s32 %s69, %s19
      %s71 = smul.u32 %s32, 2
      %s72 = sadd.s32 %s71, %s28
      %s73 = ssub.s32 %s17, %s36
      %s74 = ssub.s32 %s70, %s72
      %s75 = sor.u32 %s73, %s74
      %p76 = scmp.eq.s32.totalorder %s75, 0
      %s78 = sadd.s32 %s77, 1
      %s79 = scalar_select %p76, %s77, %s78
      %p82 = pneg %p76
      %p83 = scmp.eq.s32.totalorder %s10, 3
      %p84 = por %p82, %p83
      %p85 = scmp.ne.s32.totalorder %s77, %s80
      %p86 = scmp.eq.s32.totalorder %s10, 0
      %p87 = por %p85, %p86
      %p88 = scmp.ne.s32.totalorder %s77, %s80
      %p89 = scmp.eq.s32.totalorder %s15, 3
      %p90 = por %p88, %p89
      %p91 = scmp.ne.s32.totalorder %s80, %s81
      %p92 = scmp.eq.s32.totalorder %s15, 0
      %p93 = por %p91, %p92
      %p94 = scmp.ne.s32.totalorder %s80, %s81
      %p95 = scmp.eq.s32.totalorder %s16, 3
      %p96 = por %p94, %p95
      %p98 = scmp.ne.s32.totalorder %s81, %s97
      %p99 = scmp.eq.s32.totalorder %s16, 0
      %p100 = por %p98, %p99
      %s101 = smul.u32 %s18, 2
      %s102 = sadd.s32 %s101, %s19
      %s103 = smul.u32 %s32, 2
      %s104 = sadd.s32 %s103, %s28
      %s105 = ssub.s32 %s102, %s104
      %p106 = scmp.eq.s32.totalorder %s105, 0
      %s108 = sadd.s32 %s107, 1
      %s109 = scalar_select %p106, %s107, %s108
      %p112 = pneg %p106
      %p113 = scmp.eq.s32.totalorder %s10, 3
      %p114 = por %p112, %p113
      %p115 = scmp.ne.s32.totalorder %s107, %s110
      %p116 = scmp.eq.s32.totalorder %s10, 0
      %p117 = por %p115, %p116
      %p118 = scmp.ne.s32.totalorder %s107, %s110
      %p119 = scmp.eq.s32.totalorder %s15, 3
      %p120 = por %p118, %p119
      %p121 = scmp.ne.s32.totalorder %s110, %s111
      %p122 = scmp.eq.s32.totalorder %s15, 0
      %p123 = por %p121, %p122
      %p124 = scmp.ne.s32.totalorder %s110, %s111
      %p125 = scmp.eq.s32.totalorder %s16, 3
      %p126 = por %p124, %p125
      %p128 = scmp.ne.s32.totalorder %s111, %s127
      %p129 = scmp.eq.s32.totalorder %s16, 0
      %p130 = por %p128, %p129
      %s131 = smul.u32 %s18, 2
      %s132 = sadd.s32 %s131, %s19
      %s133 = smul.u32 %s32, 2
      %s134 = sadd.s32 %s133, %s28
      %s135 = ssub.s32 %s132, %s134
      %p136 = scmp.eq.s32.totalorder %s135, 0
      %s138 = sadd.s32 %s137, 1
      %s139 = scalar_select %p136, %s137, %s138
      %p142 = pneg %p136
      %p143 = scmp.eq.s32.totalorder %s10, 3
      %p144 = por %p142, %p143
      %p145 = scmp.ne.s32.totalorder %s137, %s140
      %p146 = scmp.eq.s32.totalorder %s10, 0
      %p147 = por %p145, %p146
      %p148 = scmp.ne.s32.totalorder %s137, %s140
      %p149 = scmp.eq.s32.totalorder %s15, 3
      %p150 = por %p148, %p149
      %p151 = scmp.ne.s32.totalorder %s140, %s141
      %p152 = scmp.eq.s32.totalorder %s15, 0
      %p153 = por %p151, %p152
      %p154 = scmp.ne.s32.totalorder %s140, %s141
      %p155 = scmp.eq.s32.totalorder %s16, 3
      %p156 = por %p154, %p155
      %p158 = scmp.ne.s32.totalorder %s141, %s157
      %p159 = scmp.eq.s32.totalorder %s16, 0
      %p160 = por %p158, %p159
      %s161 = ssub.s32 %s17, %s36
      %s162 = ssub.s32 %s18, %s32
      %s163 = sor.u32 %s161, %s162
      %p164 = scmp.eq.s32.totalorder %s163, 0
      %s166 = sadd.s32 %s165, 1
      %s167 = scalar_select %p164, %s165, %s166
      %p170 = pneg %p164
      %p171 = scmp.eq.s32.totalorder %s10, 3
      %p172 = por %p170, %p171
      %p173 = scmp.ne.s32.totalorder %s165, %s168
      %p174 = scmp.eq.s32.totalorder %s10, 0
      %p175 = por %p173, %p174
      %p176 = scmp.ne.s32.totalorder %s165, %s168
      %p177 = scmp.eq.s32.totalorder %s15, 3
      %p178 = por %p176, %p177
      %p179 = scmp.ne.s32.totalorder %s168, %s169
      %p180 = scmp.eq.s32.totalorder %s15, 0
      %p181 = por %p179, %p180
      %p182 = scmp.ne.s32.totalorder %s168, %s169
      %p183 = scmp.eq.s32.totalorder %s16, 3
      %p184 = por %p182, %p183
      %p186 = scmp.ne.s32.totalorder %s169, %s185
      %p187 = scmp.eq.s32.totalorder %s16, 0
      %p188 = por %p186, %p187
      %p189 = scmp.le.s32.totalorder 1, %s10
      %p190 = scmp.lt.s32.totalorder %s10, 5
      %p191 = pnand %p189, %p190
      %p192 = pneg %p191
      // Predicated region
      $region9: #{_forward_impl.2} parent=5 // pred_check
        _
      $region10: #{_forward_impl.2} parent=5 // pred_check_branch
        %194 = sbr.rel (%p191) target = $region12
      $region11: #{_forward_impl.2} parent=5 // pred_region
        %s195 = ssub.s32 %s10, 1
      $region12: #{_forward_impl.2} parent=5 // pred_fallthru
        _
      %p196 = scmp.lt.s32.totalorder %s10, 4
      // Predicated region
      $region13: #{_forward_impl.2} parent=5 // pred_check
        %p197 = pneg %p196
      $region14: #{_forward_impl.2} parent=5 // pred_check_branch
        %199 = sbr.rel (%p197) target = $region16
      $region15: #{_forward_impl.2} parent=5 // pred_region
        // Predicated region
        $region17: #{_forward_impl.2} parent=15 // pred_check
          %p200 = pneg %p55
        $region18: #{_forward_impl.2} parent=15 // pred_check_branch
          %202 = sbr.rel (%p200) target = $region20
        $region19: #{_forward_impl.2} parent=15 // pred_region
          %s203 = sand.u32 %s45, 1
          %s204 = sand.u32 %s45, 1
          %s205 = smul.addr %s204, 32
          %s206 = scalar_lea.vmem [#allocation2], %s205
          %s207 = smul.u32 %s18, 2
          %s208 = sadd.s32 %s207, %s19
          %s209 = smul.addr %s17, 8
          %s210 = sadd.s32 %s208, %s209
          %s211 = smul.addr %s210, 8
          %s212 = scalar_lea.vmem %s0, %s211
          // Predicated region
          $region21: #{_forward_impl.2} parent=19 // pred_check
            _
          $region22: #{_forward_impl.2} parent=19 // pred_check_branch
            %214 = sbr.rel (0) target = $region24
          $region23: #{_forward_impl.2} parent=19 // pred_region
            // Predicated region
            $region25: #{_forward_impl.2} parent=23 // pred_check
              _
            $region26: #{_forward_impl.2} parent=23 // pred_check_branch
              %216 = sbr.rel (0) target = $region28
            $region27: #{_forward_impl.2} parent=23 // pred_region
              // Predicated region
              $region40: #{_forward_impl.2} parent=27 // pred_check
                _
              $region41: #{_forward_impl.2} parent=27 // pred_check_branch
                %238 = sbr.rel (0) target = $region43
              $region42: #{_forward_impl.2} parent=27 // pred_region
                loop: start=0, step=1, limit=1
                $region44: #{_forward_impl.2} parent=42 // loop_pre_header
                  _
                $region45: #{_forward_impl.2} parent=42 // loop_header
                  %s240 = sphi 0, %s244
                  %p241 = scmp.ge.s32.totalorder %s240, 1
                  %s245 = sphi %s212, %s212
                  %s246 = sphi %s206, %s206
                $region46: #{_forward_impl.2} parent=42 // loop_header_branch
                  %243 = sbr.rel (%p241) target = $region50
                $region47: #{_forward_impl.2} parent=42 // loop_body
                  %v247 = vld [vmem:[%s245] sm:$0xff]
                  %248 = vst [vmem:[%s246] sm:$0xff] %v247
                  %v249 = vld [vmem:[%s245 + $0x10] sm:$0xff]
                  %250 = vst [vmem:[%s246 + $0x8] sm:$0xff] %v249
                  %v251 = vld [vmem:[%s245 + $0x20] sm:$0xff]
                  %252 = vst [vmem:[%s246 + $0x10] sm:$0xff] %v251
                  %v253 = vld [vmem:[%s245 + $0x30] sm:$0xff]
                  %254 = vst [vmem:[%s246 + $0x18] sm:$0xff] %v253
                $region48: #{_forward_impl.2} parent=42 // loop_footer
                  %s244 = sadd.s32 1, %s240
                $region49: #{_forward_impl.2} parent=42 // loop_footer_branch
                  %239 = sbr.rel target = $region45
                $region50: #{_forward_impl.2} parent=42 // loop_exit
                  _
              $region43: #{_forward_impl.2} parent=27 // pred_fallthru
                _
              // Predicated region
              $region51: #{_forward_impl.2} parent=27 // pred_check
                _
              $region52: #{_forward_impl.2} parent=27 // pred_check_branch
                %256 = sbr.rel target = $region54
              $region53: #{_forward_impl.2} parent=27 // pred_region
                _
              $region54: #{_forward_impl.2} parent=27 // pred_fallthru
                _
            $region28: #{_forward_impl.2} parent=23 // pred_fallthru
              _
            // Predicated region
            $region29: #{_forward_impl.2} parent=23 // pred_check
              _
            $region30: #{_forward_impl.2} parent=23 // pred_check_branch
              %218 = sbr.rel target = $region32
            $region31: #{_forward_impl.2} parent=23 // pred_region
              %s220 = ssub.s32 256, 1
              loop: start=0, step=1, limit=1
              $region33: #{_forward_impl.2} parent=31 // loop_pre_header
                _
              $region34: #{_forward_impl.2} parent=31 // loop_header
                %s222 = sphi 0, %s226
                %p223 = scmp.ge.s32.totalorder %s222, 1
                %s227 = sphi %s212, %s212
                %s228 = sphi %s206, %s206
              $region35: #{_forward_impl.2} parent=31 // loop_header_branch
                %225 = sbr.rel (%p223) target = $region39
              $region36: #{_forward_impl.2} parent=31 // loop_body
                %v229 = vld [vmem:[%s227] sm:%s220]
                %230 = vst [vmem:[%s228] sm:%s220] %v229
                %v231 = vld [vmem:[%s227 + $0x10] sm:%s220]
                %232 = vst [vmem:[%s228 + $0x8] sm:%s220] %v231
                %v233 = vld [vmem:[%s227 + $0x20] sm:%s220]
                %234 = vst [vmem:[%s228 + $0x10] sm:%s220] %v233
                %v235 = vld [vmem:[%s227 + $0x30] sm:%s220]
                %236 = vst [vmem:[%s228 + $0x18] sm:%s220] %v235
              $region37: #{_forward_impl.2} parent=31 // loop_footer
                %s226 = sadd.s32 1, %s222
              $region38: #{_forward_impl.2} parent=31 // loop_footer_branch
                %221 = sbr.rel target = $region34
              $region39: #{_forward_impl.2} parent=31 // loop_exit
                _
            $region32: #{_forward_impl.2} parent=23 // pred_fallthru
              _
          $region24: #{_forward_impl.2} parent=19 // pred_fallthru
            _
          %257 = vnop
        $region20: #{_forward_impl.2} parent=15 // pred_fallthru
          _
        // Predicated region
        $region55: #{_forward_impl.2} parent=15 // pred_check
          %p258 = pneg %p87
        $region56: #{_forward_impl.2} parent=15 // pred_check_branch
          %260 = sbr.rel (%p258) target = $region58
        $region57: #{_forward_impl.2} parent=15 // pred_region
          %s261 = sand.u32 %s77, 1
          %s262 = sand.u32 %s77, 1
          %s263 = smul.addr %s262, 40
          %s264 = scalar_lea.vmem [#allocation3], %s263
          %s265 = smul.u32 %s18, 2
          %s266 = sadd.s32 %s265, %s19
          %s267 = smul.addr %s17, 10
          %s268 = sadd.s32 %s266, %s267
          %s269 = smul.addr %s268, 8
          %s270 = scalar_lea.vmem %s1, %s269
          // Predicated region
          $region59: #{_forward_impl.2} parent=57 // pred_check
            _
          $region60: #{_forward_impl.2} parent=57 // pred_check_branch
            %272 = sbr.rel (0) target = $region62
          $region61: #{_forward_impl.2} parent=57 // pred_region
            // Predicated region
            $region63: #{_forward_impl.2} parent=61 // pred_check
              _
            $region64: #{_forward_impl.2} parent=61 // pred_check_branch
              %274 = sbr.rel (0) target = $region66
            $region65: #{_forward_impl.2} parent=61 // pred_region
              // Predicated region
              $region78: #{_forward_impl.2} parent=65 // pred_check
                _
              $region79: #{_forward_impl.2} parent=65 // pred_check_branch
                %298 = sbr.rel (0) target = $region81
              $region80: #{_forward_impl.2} parent=65 // pred_region
                loop: start=0, step=1, limit=1
                $region82: #{_forward_impl.2} parent=80 // loop_pre_header
                  _
                $region83: #{_forward_impl.2} parent=80 // loop_header
                  %s300 = sphi 0, %s304
                  %p301 = scmp.ge.s32.totalorder %s300, 1
                  %s305 = sphi %s270, %s270
                  %s306 = sphi %s264, %s264
                $region84: #{_forward_impl.2} parent=80 // loop_header_branch
                  %303 = sbr.rel (%p301) target = $region88
                $region85: #{_forward_impl.2} parent=80 // loop_body
                  %v307 = vld [vmem:[%s305] sm:$0xff]
                  %308 = vst [vmem:[%s306] sm:$0xff] %v307
                  %v309 = vld [vmem:[%s305 + $0x10] sm:$0xff]
                  %310 = vst [vmem:[%s306 + $0x8] sm:$0xff] %v309
                  %v311 = vld [vmem:[%s305 + $0x20] sm:$0xff]
                  %312 = vst [vmem:[%s306 + $0x10] sm:$0xff] %v311
                  %v313 = vld [vmem:[%s305 + $0x30] sm:$0xff]
                  %314 = vst [vmem:[%s306 + $0x18] sm:$0xff] %v313
                  %v315 = vld [vmem:[%s305 + $0x40] sm:$0xff]
                  %316 = vst [vmem:[%s306 + $0x20] sm:$0xff] %v315
                $region86: #{_forward_impl.2} parent=80 // loop_footer
                  %s304 = sadd.s32 1, %s300
                $region87: #{_forward_impl.2} parent=80 // loop_footer_branch
                  %299 = sbr.rel target = $region83
                $region88: #{_forward_impl.2} parent=80 // loop_exit
                  _
              $region81: #{_forward_impl.2} parent=65 // pred_fallthru
                _
              // Predicated region
              $region89: #{_forward_impl.2} parent=65 // pred_check
                _
              $region90: #{_forward_impl.2} parent=65 // pred_check_branch
                %318 = sbr.rel target = $region92
              $region91: #{_forward_impl.2} parent=65 // pred_region
                _
              $region92: #{_forward_impl.2} parent=65 // pred_fallthru
                _
            $region66: #{_forward_impl.2} parent=61 // pred_fallthru
              _
            // Predicated region
            $region67: #{_forward_impl.2} parent=61 // pred_check
              _
            $region68: #{_forward_impl.2} parent=61 // pred_check_branch
              %276 = sbr.rel target = $region70
            $region69: #{_forward_impl.2} parent=61 // pred_region
              %s278 = ssub.s32 256, 1
              loop: start=0, step=1, limit=1
              $region71: #{_forward_impl.2} parent=69 // loop_pre_header
                _
              $region72: #{_forward_impl.2} parent=69 // loop_header
                %s280 = sphi 0, %s284
                %p281 = scmp.ge.s32.totalorder %s280, 1
                %s285 = sphi %s270, %s270
                %s286 = sphi %s264, %s264
              $region73: #{_forward_impl.2} parent=69 // loop_header_branch
                %283 = sbr.rel (%p281) target = $region77
              $region74: #{_forward_impl.2} parent=69 // loop_body
                %v287 = vld [vmem:[%s285] sm:%s278]
                %288 = vst [vmem:[%s286] sm:%s278] %v287
                %v289 = vld [vmem:[%s285 + $0x10] sm:%s278]
                %290 = vst [vmem:[%s286 + $0x8] sm:%s278] %v289
                %v291 = vld [vmem:[%s285 + $0x20] sm:%s278]
                %292 = vst [vmem:[%s286 + $0x10] sm:%s278] %v291
                %v293 = vld [vmem:[%s285 + $0x30] sm:%s278]
                %294 = vst [vmem:[%s286 + $0x18] sm:%s278] %v293
                %v295 = vld [vmem:[%s285 + $0x40] sm:%s278]
                %296 = vst [vmem:[%s286 + $0x20] sm:%s278] %v295
              $region75: #{_forward_impl.2} parent=69 // loop_footer
                %s284 = sadd.s32 1, %s280
              $region76: #{_forward_impl.2} parent=69 // loop_footer_branch
                %279 = sbr.rel target = $region72
              $region77: #{_forward_impl.2} parent=69 // loop_exit
                _
            $region70: #{_forward_impl.2} parent=61 // pred_fallthru
              _
          $region62: #{_forward_impl.2} parent=57 // pred_fallthru
            _
          %319 = vnop
        $region58: #{_forward_impl.2} parent=15 // pred_fallthru
          _
        // Predicated region
        $region93: #{_forward_impl.2} parent=15 // pred_check
          %p320 = pneg %p117
        $region94: #{_forward_impl.2} parent=15 // pred_check_branch
          %322 = sbr.rel (%p320) target = $region96
        $region95: #{_forward_impl.2} parent=15 // pred_region
          %s323 = smul.u32 %s18, 2
          %s324 = sadd.s32 %s323, %s19
          %p325 = scmp.lt.s32.totalorder %s324, 1
          %s326 = scalar_select %p325, %s324, 1
          %s327 = scalar_lea.vmem %s2, %s326
          %s328 = smul.u32 %s18, 2
          %s329 = sadd.s32 %s328, %s19
        $region96: #{_forward_impl.2} parent=15 // pred_fallthru
          _
        // Predicated region
        $region97: #{_forward_impl.2} parent=15 // pred_check
          %p330 = pneg %p147
        $region98: #{_forward_impl.2} parent=15 // pred_check_branch
          %332 = sbr.rel (%p330) target = $region100
        $region99: #{_forward_impl.2} parent=15 // pred_region
          %s333 = smul.u32 %s18, 2
          %s334 = sadd.s32 %s333, %s19
          %p335 = scmp.lt.s32.totalorder %s334, 1
          %s336 = scalar_select %p335, %s334, 1
          %s337 = scalar_lea.vmem %s3, %s336
          %s338 = smul.u32 %s18, 2
          %s339 = sadd.s32 %s338, %s19
        $region100: #{_forward_impl.2} parent=15 // pred_fallthru
          _
      $region16: #{_forward_impl.2} parent=5 // pred_fallthru
        _
      %p340 = scmp.le.s32.totalorder 1, %s10
      %p341 = scmp.lt.s32.totalorder %s10, 5
      %p342 = pnand %p340, %p341
      %p343 = pneg %p342
      // Predicated region
      $region101: #{_forward_impl.2} parent=5 // pred_check
        _
      $region102: #{_forward_impl.2} parent=5 // pred_check_branch
        %345 = sbr.rel (%p342) target = $region104
      $region103: #{_forward_impl.2} parent=5 // pred_region
        %s346 = ssub.s32 %s10, 1
        %s347 = sand.u32 %s48, 1
        %s348 = sand.u32 %s48, 1
        %s349 = smul.addr %s348, 32
        %s350 = scalar_lea.vmem [#allocation2], %s349
        // Predicated region
        $region105: #{_forward_impl.2} parent=103 // pred_check
          %p351 = pneg %p61
        $region106: #{_forward_impl.2} parent=103 // pred_check_branch
          %353 = sbr.rel (%p351) target = $region108
        $region107: #{_forward_impl.2} parent=103 // pred_region
          _
        $region108: #{_forward_impl.2} parent=103 // pred_fallthru
          _
        %s354 = sand.u32 %s80, 1
        %s355 = sand.u32 %s80, 1
        %s356 = smul.addr %s355, 40
        %s357 = scalar_lea.vmem [#allocation3], %s356
        // Predicated region
        $region109: #{_forward_impl.2} parent=103 // pred_check
          %p358 = pneg %p93
        $region110: #{_forward_impl.2} parent=103 // pred_check_branch
          %360 = sbr.rel (%p358) target = $region112
        $region111: #{_forward_impl.2} parent=103 // pred_region
          _
        $region112: #{_forward_impl.2} parent=103 // pred_fallthru
          _
        %s361 = sand.u32 %s48, 1
        %s362 = sand.u32 %s48, 1
        %s363 = smul.addr %s362, 32
        %s364 = scalar_lea.vmem [#allocation2], %s363
        %p365 = pneg %p61
        %p366 = pneg %p58
        %s367 = sand.u32 %s80, 1
        %s368 = sand.u32 %s80, 1
        %s369 = smul.addr %s368, 40
        %s370 = scalar_lea.vmem [#allocation3], %s369
        %p371 = pneg %p93
        %p372 = pneg %p90
        %s373 = smul.u32 %s21, 2
        %s374 = sadd.s32 %s373, %s22
        %p375 = scmp.lt.s32.totalorder %s374, 1
        %s376 = scalar_select %p375, %s374, 1
        %s377 = scalar_lea.vmem %s2, %s376
        %p378 = pneg %p123
        %p379 = pneg %p120
        %s380 = smul.u32 %s21, 2
        %s381 = sadd.s32 %s380, %s22
        %p382 = scmp.lt.s32.totalorder %s381, 1
        %s383 = scalar_select %p382, %s381, 1
        %s384 = scalar_lea.vmem %s3, %s383
        %p385 = pneg %p153
        %p386 = pneg %p150
        %p387 = pneg %p181
        %p388 = pneg %p178
        %p389 = scmp.lt.s32.totalorder %s20, 1
        %s390 = scalar_select %p389, %s20, 1
        %p391 = scmp.lt.s32.totalorder %s21, 0
        %s392 = scalar_select %p391, %s21, 0
        %s393 = sadd.s32 %s392, %s390
        %s394 = smul.addr %s393, 8
        %s395 = scalar_lea.vmem %s4, %s394
        %s396 = smul.u32 %s21, 2
        %s397 = sadd.s32 %s396, %s22
        %s398 = smul.u32 %s21, 2
        %s399 = sadd.s32 %s398, %s22
        %s400 = smul.u32 %s21, 2
        %s401 = sadd.s32 %s400, %s22
        %p402 = scmp.lt.s32.totalorder %s401, 1
        %s403 = scalar_select %p402, %s401, 1
        %s404 = scalar_lea.vmem %s2, %s403
        %s405 = smul.u32 %s21, 2
        %s406 = sadd.s32 %s405, %s22
        %s407 = smul.u32 %s21, 2
        %s408 = sadd.s32 %s407, %s22
        %p409 = scmp.lt.s32.totalorder %s408, 1
        %s410 = scalar_select %p409, %s408, 1
        %s411 = scalar_lea.vmem %s3, %s410
        %s412 = smul.u32 %s21, 2
        %s413 = sadd.s32 %s412, %s22
        %p414 = scmp.lt.s32.totalorder %s20, 1
        %s415 = scalar_select %p414, %s20, 1
        %p416 = scmp.lt.s32.totalorder %s21, 0
        %s417 = scalar_select %p416, %s21, 0
        %s418 = sadd.s32 %s417, %s415
        %s419 = smul.addr %s418, 8
        %s420 = scalar_lea.vmem %s4, %s419
        %v421 = vlaneseq
        %v422 = vand.u32 %v421, 127
        %s423 = smul.u32 %s21, 2
        %s424 = sadd.s32 %s423, %s22
        %s425 = smul.u32 %s424, 128
        %v426 = vstv %s425
        %v427 = vadd.s32 %v426, %v422
        %vm428 = vcmp.lt.s32.totalorder %v427, 180
        %v429 = vld [vmem:[%s411] sm:$0x1]
        %v430 = vld [vmem:[%s404] sm:$0x1]
        %v431 = vld [vmem:[%s350] sm:$0x7f]
        %v432 = vld [vmem:[%s350 + $0x7] sm:$0x7f]
        %v433 = vld [vmem:[%s350 + $0xe] sm:$0x7f]
        %v434 = vld [vmem:[%s350 + $0x15] sm:$0x7f]
        %v435 = vld [vmem:[%s357] sm:$0x7f]
        %v436 = vld [vmem:[%s357 + $0x7] sm:$0x7f]
        %v437 = vld [vmem:[%s357 + $0xe] sm:$0x7f]
        %v438 = vld [vmem:[%s357 + $0x15] sm:$0x7f]
        %v439 = vsub.f32 1.0, %v432
        %v440 = vmul.f32 %v439, 1005.0
        %v441 = vmul.f32 %v432, 1846.0
        %v442 = vadd.f32 %v440, %v441
        %v443 = vsub.f32 1.0, %v436
        %v444 = vmul.f32 %v443, 1005.0
        %v445 = vmul.f32 %v436, 1846.0
        %v446 = vadd.f32 %v444, %v445
        %v447 = vmul.f32 %v442, %v431
        %v448 = vmul.f32 %v432, 2260000.0
        %v450 = vperm.slane %v430, 0
        %v452 = vadd.f32 %v448, %v450
        %v453 = vmul.f32 %v433, %v433
        %v454 = vmul.f32 %v434, %v434
        %v455 = vadd.f32 %v453, %v454
        %v456 = vmul.f32 %v455, 0.5
        %v457 = vadd.f32 %v452, %v456
        %v458 = vadd.f32 %v447, %v457
        %v459 = vmul.f32 %v446, %v435
        %v460 = vmul.f32 %v436, 2260000.0
        %v461 = vadd.f32 %v460, %v450
        %v462 = vmul.f32 %v437, %v437
        %v463 = vmul.f32 %v438, %v438
        %v464 = vadd.f32 %v462, %v463
        %v465 = vmul.f32 %v464, 0.5
        %v466 = vadd.f32 %v461, %v465
        %v467 = vadd.f32 %v459, %v466
        %v468 = vlaneseq
        %v469 = vshrl.u32 %v468, 7
        %vm470 = vcmp.eq.s32.totalorder %v469, 1
        %v471 = vsel %vm470, 2544.192, 1524.4757
        %vm472 = vcmp.eq.s32.totalorder %v469, 2
        %v473 = vsel %vm472, 2039.4324, %v471
        %vm474 = vcmp.eq.s32.totalorder %v469, 3
        %v475 = vsel %vm474, 1529.5743, %v473
        %vm476 = vcmp.eq.s32.totalorder %v469, 4
        %v477 = vsel %vm476, 1019.7162, %v475
        %vm478 = vcmp.eq.s32.totalorder %v469, 5
        %v479 = vsel %vm478, 1019.7162, %v477
        %vm480 = vcmp.eq.s32.totalorder %v469, 6
        %v481 = vsel %vm480, 509.8581, %v479
        %v483 = vperm.slane %v429, 0
        %v485 = vmul.f32 %v481, %v483
        %v486 = vsub.f32 %v458, %v467
        %v487 = vmul.f32 %v486, %v485
        %v488 = vsel %vm428, 1, 0
        %vm489 = vcmp.eq.s32.totalorder %v488, 1
        %v490 = vsel %vm489, %v487, 0.0
        %vm491 = vcmask 1046528
        %v492 = vsel %vm491, %v490, 0.0
        %493 = vadd.xlane.f32.xlu0 %v492
        %v494 = vpop.xlane.xlu0 %493
        %v495 = vrot.slane %v494, 4
        %v496 = vadd.f32 %v494, %v495
        %v497 = vrot.slane %v496, 2
        %v498 = vadd.f32 %v496, %v497
        %v499 = vrot.slane %v498, 1
        %v500 = vadd.f32 %v498, %v499
        %s501 = vtos %v500
        %v502 = vmul.f32 %v467, %v485
        %v503 = vsel %vm489, %v502, 0.0
        %v504 = vsel %vm491, %v503, 0.0
        %505 = vadd.xlane.f32.xlu0 %v504
        %v506 = vpop.xlane.xlu0 %505
        %v507 = vrot.slane %v506, 4
        %v508 = vadd.f32 %v506, %v507
        %v509 = vrot.slane %v508, 2
        %v510 = vadd.f32 %v508, %v509
        %v511 = vrot.slane %v510, 1
        %v512 = vadd.f32 %v510, %v511
        %s513 = vtos %v512
        %v514 = vsel %vm472, -1.0, 1.0
        %v515 = vsel %vm474, -1.0, %v514
        %v516 = vsel %vm476, -1.0, %v515
        %v517 = vsel %vm478, -1.0, %v516
        %v518 = vld [vmem:[%s357 + $0x1c] sm:$0x3f]
        %v519 = vmul.f32 %v518, %v517
        %v520 = vmul.f32 %v519, %v483
        %v521 = vsel %vm489, %v520, 0.0
        %vm522 = vcmask 1045504
        %v523 = vsel %vm522, %v521, 0.0
        %524 = vadd.xlane.f32.xlu0 %v523
        %v525 = vpop.xlane.xlu0 %524
        %v526 = vrot.slane %v525, 4
        %v527 = vadd.f32 %v525, %v526
        %v528 = vrot.slane %v527, 2
        %v529 = vadd.f32 %v527, %v528
        %v530 = vrot.slane %v529, 1
        %v531 = vadd.f32 %v529, %v530
        %s532 = vtos %v531
        %vm533 = vcmp.eq.s32.totalorder %v469, 0
        %v534 = vstv %s532
        %v535 = vsel %vm472, %v534, 0.0
        %v536 = vstv %s513
        %v537 = vsel %vm470, %v536, %v535
        %v538 = vstv %s501
        %v539 = vsel %vm533, %v538, %v537
        %p540 = scmp.eq.s32.totalorder %s22, 0
        // Predicated region
        $region113: #{_forward_impl.2} parent=103 // pred_check
          %p541 = pneg %p540
        $region114: #{_forward_impl.2} parent=103 // pred_check_branch
          %543 = sbr.rel (%p541) target = $region116
        $region115: #{_forward_impl.2} parent=103 // pred_region
          %544 = vst [vmem:[%s420] sm:$0xff] 0.0
        $region116: #{_forward_impl.2} parent=103 // pred_fallthru
          _
        %v545 = vld [vmem:[%s420] sm:$0xff]
        %v546 = vadd.f32 %v545, %v539
        %547 = vst [vmem:[%s420] sm:$0xff] %v546
        %p548 = scmp.lt.s32.totalorder %s20, 1
        %s549 = scalar_select %p548, %s20, 1
        %p550 = scmp.lt.s32.totalorder %s21, 0
        %s551 = scalar_select %p550, %s21, 0
        %s552 = sadd.s32 %s551, %s549
        %s553 = smul.addr %s552, 8
        %s554 = scalar_lea.vmem %s4, %s553
        // Predicated region
        $region117: #{_forward_impl.2} parent=103 // pred_check
          %p555 = pneg %p178
        $region118: #{_forward_impl.2} parent=103 // pred_check_branch
          %557 = sbr.rel (%p555) target = $region120
        $region119: #{_forward_impl.2} parent=103 // pred_region
          _
        $region120: #{_forward_impl.2} parent=103 // pred_fallthru
          _
      $region104: #{_forward_impl.2} parent=5 // pred_fallthru
        _
      %p558 = scmp.le.s32.totalorder 2, %s10
      // Predicated region
      $region121: #{_forward_impl.2} parent=5 // pred_check
        %p559 = pneg %p558
      $region122: #{_forward_impl.2} parent=5 // pred_check_branch
        %561 = sbr.rel (%p559) target = $region124
      $region123: #{_forward_impl.2} parent=5 // pred_region
        %s562 = ssub.s32 %s10, 2
        // Predicated region
        $region125: #{_forward_impl.2} parent=123 // pred_check
          %p563 = pneg %p184
        $region126: #{_forward_impl.2} parent=123 // pred_check_branch
          %565 = sbr.rel (%p563) target = $region128
        $region127: #{_forward_impl.2} parent=123 // pred_region
          %p566 = scmp.lt.s32.totalorder %s23, 1
          %s567 = scalar_select %p566, %s23, 1
          %p568 = scmp.lt.s32.totalorder %s24, 0
          %s569 = scalar_select %p568, %s24, 0
          %s570 = sadd.s32 %s569, %s567
          %s571 = smul.addr %s570, 8
          %s572 = scalar_lea.vmem %s4, %s571
        $region128: #{_forward_impl.2} parent=123 // pred_fallthru
          _
      $region124: #{_forward_impl.2} parent=5 // pred_fallthru
        _
    $region6: #{_forward_impl.2} parent=1 // loop_footer
      %s14 = sadd.s32 1, %s10
    $region7: #{_forward_impl.2} parent=1 // loop_footer_branch
      %9 = sbr.rel target = $region3
    $region8: #{_forward_impl.2} parent=1 // loop_exit
      _

</llo_original>
